<compile_context>
chip_gen: v6e
topology: v6e:2x2x1
jax: 0.10.0
libtpu: 0.0.40
codegen_flags: <defaults>
</compile_context>

<pallas_src>
import functools

import jax
import jax.numpy as jnp
from jax.experimental import pallas as pl
from jax.experimental.pallas import tpu as pltpu


# ----------------------------------------------------------------------------
# Fused kernel: conv1+ReLU -> conv2+ReLU -> conv3 -> sigmoid for ONE image.
# ----------------------------------------------------------------------------
def _fused_cnn_kernel(xpad_ref, w1_ref, b1_ref, w2_ref, b2_ref, w3_ref, b3_ref,
                      o_ref, *, H, W):
    """xpad_ref: (1, H+2, W+2) zero-padded image (VMEM).
    w*_ref/b*_ref: flat f32 conv weights/biases in SMEM (PyTorch row-major).
    o_ref: (1, H-3, W-3) dense conv3+sigmoid map; the true stride-4 outputs
           sit at positions [::4, ::4] (picked out by the host wrapper)."""

    # ---- conv1: 1 -> 3, 3x3, stride 1, pad 1, ReLU (9 shifted windows) ----
    win1 = [[xpad_ref[0, pl.ds(i, H), pl.ds(j, W)] for j in range(3)]
            for i in range(3)]
    h1 = []
    for c in range(3):
        acc = None
        for i in range(3):
            for j in range(3):
                term = w1_ref[c * 9 + i * 3 + j] * win1[i][j]
                acc = term if acc is None else acc + term
        h1.append(jnp.maximum(acc + b1_ref[c], 0.0))                 # (H, W)

    # ---- conv2: 3 -> 3, 2x2, stride 2, ReLU ------------------------------
    # Evaluated densely: h2[u, v] = conv2 applied at input offset (u, v);
    # the true stride-2 outputs are h2[::2, ::2].
    Hc2, Wc2 = H - 1, W - 1
    win2 = [[[h1[ci][i:i + Hc2, j:j + Wc2] for j in range(2)]
             for i in range(2)] for ci in range(3)]
    h2 = []
    for co in range(3):
        acc = None
        for ci in range(3):
            for i in range(2):
                for j in range(2):
                    term = w2_ref[co * 12 + ci * 4 + i * 2 + j] * win2[ci][i][j]
                    acc = term if acc is None else acc + term
        h2.append(jnp.maximum(acc + b2_ref[co], 0.0))                # (H-1, W-1)

    # ---- conv3: 3 -> 1, 2x2, stride 2 (dilation-2 windows on the dense map)
    Hc3, Wc3 = H - 3, W - 3
    acc = None
    for ci in range(3):
        for i in range(2):
            for j in range(2):
                term = (w3_ref[ci * 4 + i * 2 + j]
                        * h2[ci][2 * i:2 * i + Hc3, 2 * j:2 * j + Wc3])
                acc = term if acc is None else acc + term
    z = acc + b3_ref[0]                                              # (H-3, W-3)

    # Numerically stable sigmoid (never overflows for large |z|).
    ez = jnp.exp(-jnp.abs(z))
    o_ref[0] = (jnp.where(z >= 0.0, 1.0, ez) / (1.0 + ez)).astype(o_ref.dtype)


# ----------------------------------------------------------------------------
# Host-side wrapper
# ----------------------------------------------------------------------------
def trained_cnn_forward(packed, x):
    """x: (N, 1, H, W) with H, W multiples of 4. Returns (N, (H//4)*(W//4))."""
    N, Cin, H, W = x.shape
    assert Cin == 1 and H % 4 == 0 and W % 4 == 0

    # Only host-side prep: one zero-pad of the raw input (pad=1 of conv1).
    xpad = jnp.pad(x[:, 0].astype(jnp.float32), ((0, 0), (1, 1), (1, 1)))

    kernel = functools.partial(_fused_cnn_kernel, H=H, W=W)
    smem = pl.BlockSpec(memory_space=pltpu.MemorySpace.SMEM)
    dense = pl.pallas_call(
        kernel,
        out_shape=jax.ShapeDtypeStruct((N, H - 3, W - 3), jnp.float32),
        grid=(N,),
        in_specs=[
            pl.BlockSpec((1, H + 2, W + 2), lambda n: (n, 0, 0)),
            smem, smem, smem, smem, smem, smem,
        ],
        out_specs=pl.BlockSpec((1, H - 3, W - 3), lambda n: (n, 0, 0)),
        compiler_params=pltpu.CompilerParams(
            dimension_semantics=("parallel",)),
    )(xpad, packed["w1"], packed["b1"], packed["w2"], packed["b2"],
      packed["w3"], packed["b3"])

    # True stride-4 positions of the dense conv3 map, then Flatten.
    out = dense[:, ::4, ::4]                                   # (N, H//4, W//4)
    return out.reshape(N, (H // 4) * (W // 4))


# ----------------------------------------------------------------------------
# Parameters: deterministic init + one-off packing into kernel layout
# ----------------------------------------------------------------------------
def init_params(key):
    def conv_init(key, cout, cin, kh, kw):
        kw_, kb_ = jax.random.split(key)
        fan_in = cin * kh * kw
        bound = fan_in ** -0.5
        w = jax.random.uniform(kw_, (cout, cin, kh, kw), jnp.float32, -bound, bound)
        b = jax.random.uniform(kb_, (cout,), jnp.float32, -bound, bound)
        return w, b

    k1, k2, k3 = jax.random.split(key, 3)
    return {
        "conv1": conv_init(k1, 3, 1, 3, 3),
        "conv2": conv_init(k2, 3, 3, 2, 2),
        "conv3": conv_init(k3, 1, 3, 2, 2),
    }


def prepack_params(params):
    """One-off packing: flat f32 arrays in PyTorch row-major order (SMEM-sized)."""
    w1, b1 = params["conv1"]
    w2, b2 = params["conv2"]
    w3, b3 = params["conv3"]
    return {
        "w1": w1.reshape(-1).astype(jnp.float32),   # (27,)  [c, i, j]
        "b1": b1.astype(jnp.float32),               # (3,)
        "w2": w2.reshape(-1).astype(jnp.float32),   # (36,)  [co, ci, i, j]
        "b2": b2.astype(jnp.float32),               # (3,)
        "w3": w3.reshape(-1).astype(jnp.float32),   # (12,)  [ci, i, j]
        "b3": b3.reshape(-1).astype(jnp.float32),   # (1,)
    }


# ----------------------------------------------------------------------------
# Pure-JAX reference (for correctness checking only)
# ----------------------------------------------------------------------------
def _reference_forward(params, x):
    dn = ("NCHW", "OIHW", "NCHW")
    hp = jax.lax.Precision.HIGHEST
    w1, b1 = params["conv1"]
    w2, b2 = params["conv2"]
    w3, b3 = params["conv3"]
    h = jax.lax.conv_general_dilated(x, w1, (1, 1), ((1, 1), (1, 1)),
                                     dimension_numbers=dn, precision=hp)
    h = jnp.maximum(h + b1[None, :, None, None], 0.0)
    h = jax.lax.conv_general_dilated(h, w2, (2, 2), ((0, 0), (0, 0)),
                                     dimension_numbers=dn, precision=hp)
    h = jnp.maximum(h + b2[None, :, None, None], 0.0)
    h = jax.lax.conv_general_dilated(h, w3, (2, 2), ((0, 0), (0, 0)),
                                     dimension_numbers=dn, precision=hp)
    h = h + b3[None, :, None, None]
    return jax.nn.sigmoid(h.reshape(x.shape[0], -1))


if __name__ == "__main__":
    key = jax.random.PRNGKey(0)
    pkey, xkey = jax.random.split(key)
    params = init_params(pkey)
    packed = prepack_params(params)

    # Input: batch=2, channels=1 (module requires Cin=1), spatial=16x16.
    x = jax.random.normal(xkey, (2, 1, 16, 16), dtype=jnp.float32)

    fwd = jax.jit(trained_cnn_forward)
    out = jax.block_until_ready(fwd(packed, x))

    assert out.shape == (2, 16), out.shape
    assert bool(jnp.all((out > 0.0) & (out < 1.0)))  # sigmoid range sanity check

    ref = _reference_forward(params, x)
    assert bool(jnp.allclose(out, ref, atol=1e-4, rtol=1e-4)), (
        float(jnp.max(jnp.abs(out - ref))))

    print("KERNEL_OK")
</pallas_src>

<mosaic_0001>
module attributes {stable_mosaic.version = 11 : i64} {
  func.func @_fused_cnn_kernel(%arg0: i32, %arg1: memref<1x18x18xf32, #tpu.memory_space<vmem>>, %arg2: memref<27xf32, #tpu.memory_space<smem>>, %arg3: memref<3xf32, #tpu.memory_space<smem>>, %arg4: memref<36xf32, #tpu.memory_space<smem>>, %arg5: memref<3xf32, #tpu.memory_space<smem>>, %arg6: memref<12xf32, #tpu.memory_space<smem>>, %arg7: memref<1xf32, #tpu.memory_space<smem>>, %arg8: memref<1x13x13xf32, #tpu.memory_space<vmem>>) attributes {dimension_semantics = [#tpu.dimension_semantics<parallel>], iteration_bounds = array<i64: 2>, scalar_prefetch = 0 : i64, scratch_operands = 0 : i64, tpu.core_type = #tpu.core_type<tc>, window_params = [{transform_indices = @transform_0, window_bounds = array<i64: 1, 18, 18>}, {transform_indices = @transform_1, window_bounds = array<i64: 27>}, {transform_indices = @transform_2, window_bounds = array<i64: 3>}, {transform_indices = @transform_3, window_bounds = array<i64: 36>}, {transform_indices = @transform_4, window_bounds = array<i64: 3>}, {transform_indices = @transform_5, window_bounds = array<i64: 12>}, {transform_indices = @transform_6, window_bounds = array<i64: 1>}, {transform_indices = @transform_7, window_bounds = array<i64: 1, 13, 13>}]} {
    %c0 = arith.constant 0 : index
    %c0_0 = arith.constant 0 : index
    %c0_1 = arith.constant 0 : index
    %0 = vector.load %arg1[%c0, %c0_0, %c0_1] : memref<1x18x18xf32, #tpu.memory_space<vmem>>, vector<1x16x16xf32>
    %1 = vector.shape_cast %0 : vector<1x16x16xf32> to vector<16x16xf32>
    %c0_2 = arith.constant 0 : index
    %c0_3 = arith.constant 0 : index
    %c1 = arith.constant 1 : index
    %2 = vector.load %arg1[%c0_2, %c0_3, %c1] : memref<1x18x18xf32, #tpu.memory_space<vmem>>, vector<1x16x16xf32>
    %3 = vector.shape_cast %2 : vector<1x16x16xf32> to vector<16x16xf32>
    %c0_4 = arith.constant 0 : index
    %c0_5 = arith.constant 0 : index
    %c2 = arith.constant 2 : index
    %4 = vector.load %arg1[%c0_4, %c0_5, %c2] : memref<1x18x18xf32, #tpu.memory_space<vmem>>, vector<1x16x16xf32>
    %5 = vector.shape_cast %4 : vector<1x16x16xf32> to vector<16x16xf32>
    %c0_6 = arith.constant 0 : index
    %c1_7 = arith.constant 1 : index
    %c0_8 = arith.constant 0 : index
    %6 = vector.load %arg1[%c0_6, %c1_7, %c0_8] : memref<1x18x18xf32, #tpu.memory_space<vmem>>, vector<1x16x16xf32>
    %7 = vector.shape_cast %6 : vector<1x16x16xf32> to vector<16x16xf32>
    %c0_9 = arith.constant 0 : index
    %c1_10 = arith.constant 1 : index
    %c1_11 = arith.constant 1 : index
    %8 = vector.load %arg1[%c0_9, %c1_10, %c1_11] : memref<1x18x18xf32, #tpu.memory_space<vmem>>, vector<1x16x16xf32>
    %9 = vector.shape_cast %8 : vector<1x16x16xf32> to vector<16x16xf32>
    %c0_12 = arith.constant 0 : index
    %c1_13 = arith.constant 1 : index
    %c2_14 = arith.constant 2 : index
    %10 = vector.load %arg1[%c0_12, %c1_13, %c2_14] : memref<1x18x18xf32, #tpu.memory_space<vmem>>, vector<1x16x16xf32>
    %11 = vector.shape_cast %10 : vector<1x16x16xf32> to vector<16x16xf32>
    %c0_15 = arith.constant 0 : index
    %c2_16 = arith.constant 2 : index
    %c0_17 = arith.constant 0 : index
    %12 = vector.load %arg1[%c0_15, %c2_16, %c0_17] : memref<1x18x18xf32, #tpu.memory_space<vmem>>, vector<1x16x16xf32>
    %13 = vector.shape_cast %12 : vector<1x16x16xf32> to vector<16x16xf32>
    %c0_18 = arith.constant 0 : index
    %c2_19 = arith.constant 2 : index
    %c1_20 = arith.constant 1 : index
    %14 = vector.load %arg1[%c0_18, %c2_19, %c1_20] : memref<1x18x18xf32, #tpu.memory_space<vmem>>, vector<1x16x16xf32>
    %15 = vector.shape_cast %14 : vector<1x16x16xf32> to vector<16x16xf32>
    %c0_21 = arith.constant 0 : index
    %c2_22 = arith.constant 2 : index
    %c2_23 = arith.constant 2 : index
    %16 = vector.load %arg1[%c0_21, %c2_22, %c2_23] : memref<1x18x18xf32, #tpu.memory_space<vmem>>, vector<1x16x16xf32>
    %17 = vector.shape_cast %16 : vector<1x16x16xf32> to vector<16x16xf32>
    %c0_24 = arith.constant 0 : index
    %18 = memref.load %arg2[%c0_24] : memref<27xf32, #tpu.memory_space<smem>>
    %19 = vector.broadcast %18 : f32 to vector<16x16xf32>
    %20 = arith.mulf %19, %1 : vector<16x16xf32>
    %c1_25 = arith.constant 1 : index
    %21 = memref.load %arg2[%c1_25] : memref<27xf32, #tpu.memory_space<smem>>
    %22 = vector.broadcast %21 : f32 to vector<16x16xf32>
    %23 = arith.mulf %22, %3 : vector<16x16xf32>
    %24 = arith.addf %20, %23 : vector<16x16xf32>
    %c2_26 = arith.constant 2 : index
    %25 = memref.load %arg2[%c2_26] : memref<27xf32, #tpu.memory_space<smem>>
    %26 = vector.broadcast %25 : f32 to vector<16x16xf32>
    %27 = arith.mulf %26, %5 : vector<16x16xf32>
    %28 = arith.addf %24, %27 : vector<16x16xf32>
    %c3 = arith.constant 3 : index
    %29 = memref.load %arg2[%c3] : memref<27xf32, #tpu.memory_space<smem>>
    %30 = vector.broadcast %29 : f32 to vector<16x16xf32>
    %31 = arith.mulf %30, %7 : vector<16x16xf32>
    %32 = arith.addf %28, %31 : vector<16x16xf32>
    %c4 = arith.constant 4 : index
    %33 = memref.load %arg2[%c4] : memref<27xf32, #tpu.memory_space<smem>>
    %34 = vector.broadcast %33 : f32 to vector<16x16xf32>
    %35 = arith.mulf %34, %9 : vector<16x16xf32>
    %36 = arith.addf %32, %35 : vector<16x16xf32>
    %c5 = arith.constant 5 : index
    %37 = memref.load %arg2[%c5] : memref<27xf32, #tpu.memory_space<smem>>
    %38 = vector.broadcast %37 : f32 to vector<16x16xf32>
    %39 = arith.mulf %38, %11 : vector<16x16xf32>
    %40 = arith.addf %36, %39 : vector<16x16xf32>
    %c6 = arith.constant 6 : index
    %41 = memref.load %arg2[%c6] : memref<27xf32, #tpu.memory_space<smem>>
    %42 = vector.broadcast %41 : f32 to vector<16x16xf32>
    %43 = arith.mulf %42, %13 : vector<16x16xf32>
    %44 = arith.addf %40, %43 : vector<16x16xf32>
    %c7 = arith.constant 7 : index
    %45 = memref.load %arg2[%c7] : memref<27xf32, #tpu.memory_space<smem>>
    %46 = vector.broadcast %45 : f32 to vector<16x16xf32>
    %47 = arith.mulf %46, %15 : vector<16x16xf32>
    %48 = arith.addf %44, %47 : vector<16x16xf32>
    %c8 = arith.constant 8 : index
    %49 = memref.load %arg2[%c8] : memref<27xf32, #tpu.memory_space<smem>>
    %50 = vector.broadcast %49 : f32 to vector<16x16xf32>
    %51 = arith.mulf %50, %17 : vector<16x16xf32>
    %52 = arith.addf %48, %51 : vector<16x16xf32>
    %c0_27 = arith.constant 0 : index
    %53 = memref.load %arg3[%c0_27] : memref<3xf32, #tpu.memory_space<smem>>
    %54 = vector.broadcast %53 : f32 to vector<16x16xf32>
    %55 = arith.addf %52, %54 : vector<16x16xf32>
    %cst = arith.constant 0.000000e+00 : f32
    %56 = vector.broadcast %cst : f32 to vector<16x16xf32>
    %57 = arith.maximumf %55, %56 : vector<16x16xf32>
    %c9 = arith.constant 9 : index
    %58 = memref.load %arg2[%c9] : memref<27xf32, #tpu.memory_space<smem>>
    %59 = vector.broadcast %58 : f32 to vector<16x16xf32>
    %60 = arith.mulf %59, %1 : vector<16x16xf32>
    %c10 = arith.constant 10 : index
    %61 = memref.load %arg2[%c10] : memref<27xf32, #tpu.memory_space<smem>>
    %62 = vector.broadcast %61 : f32 to vector<16x16xf32>
    %63 = arith.mulf %62, %3 : vector<16x16xf32>
    %64 = arith.addf %60, %63 : vector<16x16xf32>
    %c11 = arith.constant 11 : index
    %65 = memref.load %arg2[%c11] : memref<27xf32, #tpu.memory_space<smem>>
    %66 = vector.broadcast %65 : f32 to vector<16x16xf32>
    %67 = arith.mulf %66, %5 : vector<16x16xf32>
    %68 = arith.addf %64, %67 : vector<16x16xf32>
    %c12 = arith.constant 12 : index
    %69 = memref.load %arg2[%c12] : memref<27xf32, #tpu.memory_space<smem>>
    %70 = vector.broadcast %69 : f32 to vector<16x16xf32>
    %71 = arith.mulf %70, %7 : vector<16x16xf32>
    %72 = arith.addf %68, %71 : vector<16x16xf32>
    %c13 = arith.constant 13 : index
    %73 = memref.load %arg2[%c13] : memref<27xf32, #tpu.memory_space<smem>>
    %74 = vector.broadcast %73 : f32 to vector<16x16xf32>
    %75 = arith.mulf %74, %9 : vector<16x16xf32>
    %76 = arith.addf %72, %75 : vector<16x16xf32>
    %c14 = arith.constant 14 : index
    %77 = memref.load %arg2[%c14] : memref<27xf32, #tpu.memory_space<smem>>
    %78 = vector.broadcast %77 : f32 to vector<16x16xf32>
    %79 = arith.mulf %78, %11 : vector<16x16xf32>
    %80 = arith.addf %76, %79 : vector<16x16xf32>
    %c15 = arith.constant 15 : index
    %81 = memref.load %arg2[%c15] : memref<27xf32, #tpu.memory_space<smem>>
    %82 = vector.broadcast %81 : f32 to vector<16x16xf32>
    %83 = arith.mulf %82, %13 : vector<16x16xf32>
    %84 = arith.addf %80, %83 : vector<16x16xf32>
    %c16 = arith.constant 16 : index
    %85 = memref.load %arg2[%c16] : memref<27xf32, #tpu.memory_space<smem>>
    %86 = vector.broadcast %85 : f32 to vector<16x16xf32>
    %87 = arith.mulf %86, %15 : vector<16x16xf32>
    %88 = arith.addf %84, %87 : vector<16x16xf32>
    %c17 = arith.constant 17 : index
    %89 = memref.load %arg2[%c17] : memref<27xf32, #tpu.memory_space<smem>>
    %90 = vector.broadcast %89 : f32 to vector<16x16xf32>
    %91 = arith.mulf %90, %17 : vector<16x16xf32>
    %92 = arith.addf %88, %91 : vector<16x16xf32>
    %c1_28 = arith.constant 1 : index
    %93 = memref.load %arg3[%c1_28] : memref<3xf32, #tpu.memory_space<smem>>
    %94 = vector.broadcast %93 : f32 to vector<16x16xf32>
    %95 = arith.addf %92, %94 : vector<16x16xf32>
    %cst_29 = arith.constant 0.000000e+00 : f32
    %96 = vector.broadcast %cst_29 : f32 to vector<16x16xf32>
    %97 = arith.maximumf %95, %96 : vector<16x16xf32>
    %c18 = arith.constant 18 : index
    %98 = memref.load %arg2[%c18] : memref<27xf32, #tpu.memory_space<smem>>
    %99 = vector.broadcast %98 : f32 to vector<16x16xf32>
    %100 = arith.mulf %99, %1 : vector<16x16xf32>
    %c19 = arith.constant 19 : index
    %101 = memref.load %arg2[%c19] : memref<27xf32, #tpu.memory_space<smem>>
    %102 = vector.broadcast %101 : f32 to vector<16x16xf32>
    %103 = arith.mulf %102, %3 : vector<16x16xf32>
    %104 = arith.addf %100, %103 : vector<16x16xf32>
    %c20 = arith.constant 20 : index
    %105 = memref.load %arg2[%c20] : memref<27xf32, #tpu.memory_space<smem>>
    %106 = vector.broadcast %105 : f32 to vector<16x16xf32>
    %107 = arith.mulf %106, %5 : vector<16x16xf32>
    %108 = arith.addf %104, %107 : vector<16x16xf32>
    %c21 = arith.constant 21 : index
    %109 = memref.load %arg2[%c21] : memref<27xf32, #tpu.memory_space<smem>>
    %110 = vector.broadcast %109 : f32 to vector<16x16xf32>
    %111 = arith.mulf %110, %7 : vector<16x16xf32>
    %112 = arith.addf %108, %111 : vector<16x16xf32>
    %c22 = arith.constant 22 : index
    %113 = memref.load %arg2[%c22] : memref<27xf32, #tpu.memory_space<smem>>
    %114 = vector.broadcast %113 : f32 to vector<16x16xf32>
    %115 = arith.mulf %114, %9 : vector<16x16xf32>
    %116 = arith.addf %112, %115 : vector<16x16xf32>
    %c23 = arith.constant 23 : index
    %117 = memref.load %arg2[%c23] : memref<27xf32, #tpu.memory_space<smem>>
    %118 = vector.broadcast %117 : f32 to vector<16x16xf32>
    %119 = arith.mulf %118, %11 : vector<16x16xf32>
    %120 = arith.addf %116, %119 : vector<16x16xf32>
    %c24 = arith.constant 24 : index
    %121 = memref.load %arg2[%c24] : memref<27xf32, #tpu.memory_space<smem>>
    %122 = vector.broadcast %121 : f32 to vector<16x16xf32>
    %123 = arith.mulf %122, %13 : vector<16x16xf32>
    %124 = arith.addf %120, %123 : vector<16x16xf32>
    %c25 = arith.constant 25 : index
    %125 = memref.load %arg2[%c25] : memref<27xf32, #tpu.memory_space<smem>>
    %126 = vector.broadcast %125 : f32 to vector<16x16xf32>
    %127 = arith.mulf %126, %15 : vector<16x16xf32>
    %128 = arith.addf %124, %127 : vector<16x16xf32>
    %c26 = arith.constant 26 : index
    %129 = memref.load %arg2[%c26] : memref<27xf32, #tpu.memory_space<smem>>
    %130 = vector.broadcast %129 : f32 to vector<16x16xf32>
    %131 = arith.mulf %130, %17 : vector<16x16xf32>
    %132 = arith.addf %128, %131 : vector<16x16xf32>
    %c2_30 = arith.constant 2 : index
    %133 = memref.load %arg3[%c2_30] : memref<3xf32, #tpu.memory_space<smem>>
    %134 = vector.broadcast %133 : f32 to vector<16x16xf32>
    %135 = arith.addf %132, %134 : vector<16x16xf32>
    %cst_31 = arith.constant 0.000000e+00 : f32
    %136 = vector.broadcast %cst_31 : f32 to vector<16x16xf32>
    %137 = arith.maximumf %135, %136 : vector<16x16xf32>
    %138 = vector.extract_strided_slice %57 {offsets = [0, 0], sizes = [15, 15], strides = [1, 1]} : vector<16x16xf32> to vector<15x15xf32>
    %139 = vector.extract_strided_slice %57 {offsets = [0, 1], sizes = [15, 15], strides = [1, 1]} : vector<16x16xf32> to vector<15x15xf32>
    %140 = vector.extract_strided_slice %57 {offsets = [1, 0], sizes = [15, 15], strides = [1, 1]} : vector<16x16xf32> to vector<15x15xf32>
    %141 = vector.extract_strided_slice %57 {offsets = [1, 1], sizes = [15, 15], strides = [1, 1]} : vector<16x16xf32> to vector<15x15xf32>
    %142 = vector.extract_strided_slice %97 {offsets = [0, 0], sizes = [15, 15], strides = [1, 1]} : vector<16x16xf32> to vector<15x15xf32>
    %143 = vector.extract_strided_slice %97 {offsets = [0, 1], sizes = [15, 15], strides = [1, 1]} : vector<16x16xf32> to vector<15x15xf32>
    %144 = vector.extract_strided_slice %97 {offsets = [1, 0], sizes = [15, 15], strides = [1, 1]} : vector<16x16xf32> to vector<15x15xf32>
    %145 = vector.extract_strided_slice %97 {offsets = [1, 1], sizes = [15, 15], strides = [1, 1]} : vector<16x16xf32> to vector<15x15xf32>
    %146 = vector.extract_strided_slice %137 {offsets = [0, 0], sizes = [15, 15], strides = [1, 1]} : vector<16x16xf32> to vector<15x15xf32>
    %147 = vector.extract_strided_slice %137 {offsets = [0, 1], sizes = [15, 15], strides = [1, 1]} : vector<16x16xf32> to vector<15x15xf32>
    %148 = vector.extract_strided_slice %137 {offsets = [1, 0], sizes = [15, 15], strides = [1, 1]} : vector<16x16xf32> to vector<15x15xf32>
    %149 = vector.extract_strided_slice %137 {offsets = [1, 1], sizes = [15, 15], strides = [1, 1]} : vector<16x16xf32> to vector<15x15xf32>
    %c0_32 = arith.constant 0 : index
    %150 = memref.load %arg4[%c0_32] : memref<36xf32, #tpu.memory_space<smem>>
    %151 = vector.broadcast %150 : f32 to vector<15x15xf32>
    %152 = arith.mulf %151, %138 : vector<15x15xf32>
    %c1_33 = arith.constant 1 : index
    %153 = memref.load %arg4[%c1_33] : memref<36xf32, #tpu.memory_space<smem>>
    %154 = vector.broadcast %153 : f32 to vector<15x15xf32>
    %155 = arith.mulf %154, %139 : vector<15x15xf32>
    %156 = arith.addf %152, %155 : vector<15x15xf32>
    %c2_34 = arith.constant 2 : index
    %157 = memref.load %arg4[%c2_34] : memref<36xf32, #tpu.memory_space<smem>>
    %158 = vector.broadcast %157 : f32 to vector<15x15xf32>
    %159 = arith.mulf %158, %140 : vector<15x15xf32>
    %160 = arith.addf %156, %159 : vector<15x15xf32>
    %c3_35 = arith.constant 3 : index
    %161 = memref.load %arg4[%c3_35] : memref<36xf32, #tpu.memory_space<smem>>
    %162 = vector.broadcast %161 : f32 to vector<15x15xf32>
    %163 = arith.mulf %162, %141 : vector<15x15xf32>
    %164 = arith.addf %160, %163 : vector<15x15xf32>
    %c4_36 = arith.constant 4 : index
    %165 = memref.load %arg4[%c4_36] : memref<36xf32, #tpu.memory_space<smem>>
    %166 = vector.broadcast %165 : f32 to vector<15x15xf32>
    %167 = arith.mulf %166, %142 : vector<15x15xf32>
    %168 = arith.addf %164, %167 : vector<15x15xf32>
    %c5_37 = arith.constant 5 : index
    %169 = memref.load %arg4[%c5_37] : memref<36xf32, #tpu.memory_space<smem>>
    %170 = vector.broadcast %169 : f32 to vector<15x15xf32>
    %171 = arith.mulf %170, %143 : vector<15x15xf32>
    %172 = arith.addf %168, %171 : vector<15x15xf32>
    %c6_38 = arith.constant 6 : index
    %173 = memref.load %arg4[%c6_38] : memref<36xf32, #tpu.memory_space<smem>>
    %174 = vector.broadcast %173 : f32 to vector<15x15xf32>
    %175 = arith.mulf %174, %144 : vector<15x15xf32>
    %176 = arith.addf %172, %175 : vector<15x15xf32>
    %c7_39 = arith.constant 7 : index
    %177 = memref.load %arg4[%c7_39] : memref<36xf32, #tpu.memory_space<smem>>
    %178 = vector.broadcast %177 : f32 to vector<15x15xf32>
    %179 = arith.mulf %178, %145 : vector<15x15xf32>
    %180 = arith.addf %176, %179 : vector<15x15xf32>
    %c8_40 = arith.constant 8 : index
    %181 = memref.load %arg4[%c8_40] : memref<36xf32, #tpu.memory_space<smem>>
    %182 = vector.broadcast %181 : f32 to vector<15x15xf32>
    %183 = arith.mulf %182, %146 : vector<15x15xf32>
    %184 = arith.addf %180, %183 : vector<15x15xf32>
    %c9_41 = arith.constant 9 : index
    %185 = memref.load %arg4[%c9_41] : memref<36xf32, #tpu.memory_space<smem>>
    %186 = vector.broadcast %185 : f32 to vector<15x15xf32>
    %187 = arith.mulf %186, %147 : vector<15x15xf32>
    %188 = arith.addf %184, %187 : vector<15x15xf32>
    %c10_42 = arith.constant 10 : index
    %189 = memref.load %arg4[%c10_42] : memref<36xf32, #tpu.memory_space<smem>>
    %190 = vector.broadcast %189 : f32 to vector<15x15xf32>
    %191 = arith.mulf %190, %148 : vector<15x15xf32>
    %192 = arith.addf %188, %191 : vector<15x15xf32>
    %c11_43 = arith.constant 11 : index
    %193 = memref.load %arg4[%c11_43] : memref<36xf32, #tpu.memory_space<smem>>
    %194 = vector.broadcast %193 : f32 to vector<15x15xf32>
    %195 = arith.mulf %194, %149 : vector<15x15xf32>
    %196 = arith.addf %192, %195 : vector<15x15xf32>
    %c0_44 = arith.constant 0 : index
    %197 = memref.load %arg5[%c0_44] : memref<3xf32, #tpu.memory_space<smem>>
    %198 = vector.broadcast %197 : f32 to vector<15x15xf32>
    %199 = arith.addf %196, %198 : vector<15x15xf32>
    %cst_45 = arith.constant 0.000000e+00 : f32
    %200 = vector.broadcast %cst_45 : f32 to vector<15x15xf32>
    %201 = arith.maximumf %199, %200 : vector<15x15xf32>
    %c12_46 = arith.constant 12 : index
    %202 = memref.load %arg4[%c12_46] : memref<36xf32, #tpu.memory_space<smem>>
    %203 = vector.broadcast %202 : f32 to vector<15x15xf32>
    %204 = arith.mulf %203, %138 : vector<15x15xf32>
    %c13_47 = arith.constant 13 : index
    %205 = memref.load %arg4[%c13_47] : memref<36xf32, #tpu.memory_space<smem>>
    %206 = vector.broadcast %205 : f32 to vector<15x15xf32>
    %207 = arith.mulf %206, %139 : vector<15x15xf32>
    %208 = arith.addf %204, %207 : vector<15x15xf32>
    %c14_48 = arith.constant 14 : index
    %209 = memref.load %arg4[%c14_48] : memref<36xf32, #tpu.memory_space<smem>>
    %210 = vector.broadcast %209 : f32 to vector<15x15xf32>
    %211 = arith.mulf %210, %140 : vector<15x15xf32>
    %212 = arith.addf %208, %211 : vector<15x15xf32>
    %c15_49 = arith.constant 15 : index
    %213 = memref.load %arg4[%c15_49] : memref<36xf32, #tpu.memory_space<smem>>
    %214 = vector.broadcast %213 : f32 to vector<15x15xf32>
    %215 = arith.mulf %214, %141 : vector<15x15xf32>
    %216 = arith.addf %212, %215 : vector<15x15xf32>
    %c16_50 = arith.constant 16 : index
    %217 = memref.load %arg4[%c16_50] : memref<36xf32, #tpu.memory_space<smem>>
    %218 = vector.broadcast %217 : f32 to vector<15x15xf32>
    %219 = arith.mulf %218, %142 : vector<15x15xf32>
    %220 = arith.addf %216, %219 : vector<15x15xf32>
    %c17_51 = arith.constant 17 : index
    %221 = memref.load %arg4[%c17_51] : memref<36xf32, #tpu.memory_space<smem>>
    %222 = vector.broadcast %221 : f32 to vector<15x15xf32>
    %223 = arith.mulf %222, %143 : vector<15x15xf32>
    %224 = arith.addf %220, %223 : vector<15x15xf32>
    %c18_52 = arith.constant 18 : index
    %225 = memref.load %arg4[%c18_52] : memref<36xf32, #tpu.memory_space<smem>>
    %226 = vector.broadcast %225 : f32 to vector<15x15xf32>
    %227 = arith.mulf %226, %144 : vector<15x15xf32>
    %228 = arith.addf %224, %227 : vector<15x15xf32>
    %c19_53 = arith.constant 19 : index
    %229 = memref.load %arg4[%c19_53] : memref<36xf32, #tpu.memory_space<smem>>
    %230 = vector.broadcast %229 : f32 to vector<15x15xf32>
    %231 = arith.mulf %230, %145 : vector<15x15xf32>
    %232 = arith.addf %228, %231 : vector<15x15xf32>
    %c20_54 = arith.constant 20 : index
    %233 = memref.load %arg4[%c20_54] : memref<36xf32, #tpu.memory_space<smem>>
    %234 = vector.broadcast %233 : f32 to vector<15x15xf32>
    %235 = arith.mulf %234, %146 : vector<15x15xf32>
    %236 = arith.addf %232, %235 : vector<15x15xf32>
    %c21_55 = arith.constant 21 : index
    %237 = memref.load %arg4[%c21_55] : memref<36xf32, #tpu.memory_space<smem>>
    %238 = vector.broadcast %237 : f32 to vector<15x15xf32>
    %239 = arith.mulf %238, %147 : vector<15x15xf32>
    %240 = arith.addf %236, %239 : vector<15x15xf32>
    %c22_56 = arith.constant 22 : index
    %241 = memref.load %arg4[%c22_56] : memref<36xf32, #tpu.memory_space<smem>>
    %242 = vector.broadcast %241 : f32 to vector<15x15xf32>
    %243 = arith.mulf %242, %148 : vector<15x15xf32>
    %244 = arith.addf %240, %243 : vector<15x15xf32>
    %c23_57 = arith.constant 23 : index
    %245 = memref.load %arg4[%c23_57] : memref<36xf32, #tpu.memory_space<smem>>
    %246 = vector.broadcast %245 : f32 to vector<15x15xf32>
    %247 = arith.mulf %246, %149 : vector<15x15xf32>
    %248 = arith.addf %244, %247 : vector<15x15xf32>
    %c1_58 = arith.constant 1 : index
    %249 = memref.load %arg5[%c1_58] : memref<3xf32, #tpu.memory_space<smem>>
    %250 = vector.broadcast %249 : f32 to vector<15x15xf32>
    %251 = arith.addf %248, %250 : vector<15x15xf32>
    %cst_59 = arith.constant 0.000000e+00 : f32
    %252 = vector.broadcast %cst_59 : f32 to vector<15x15xf32>
    %253 = arith.maximumf %251, %252 : vector<15x15xf32>
    %c24_60 = arith.constant 24 : index
    %254 = memref.load %arg4[%c24_60] : memref<36xf32, #tpu.memory_space<smem>>
    %255 = vector.broadcast %254 : f32 to vector<15x15xf32>
    %256 = arith.mulf %255, %138 : vector<15x15xf32>
    %c25_61 = arith.constant 25 : index
    %257 = memref.load %arg4[%c25_61] : memref<36xf32, #tpu.memory_space<smem>>
    %258 = vector.broadcast %257 : f32 to vector<15x15xf32>
    %259 = arith.mulf %258, %139 : vector<15x15xf32>
    %260 = arith.addf %256, %259 : vector<15x15xf32>
    %c26_62 = arith.constant 26 : index
    %261 = memref.load %arg4[%c26_62] : memref<36xf32, #tpu.memory_space<smem>>
    %262 = vector.broadcast %261 : f32 to vector<15x15xf32>
    %263 = arith.mulf %262, %140 : vector<15x15xf32>
    %264 = arith.addf %260, %263 : vector<15x15xf32>
    %c27 = arith.constant 27 : index
    %265 = memref.load %arg4[%c27] : memref<36xf32, #tpu.memory_space<smem>>
    %266 = vector.broadcast %265 : f32 to vector<15x15xf32>
    %267 = arith.mulf %266, %141 : vector<15x15xf32>
    %268 = arith.addf %264, %267 : vector<15x15xf32>
    %c28 = arith.constant 28 : index
    %269 = memref.load %arg4[%c28] : memref<36xf32, #tpu.memory_space<smem>>
    %270 = vector.broadcast %269 : f32 to vector<15x15xf32>
    %271 = arith.mulf %270, %142 : vector<15x15xf32>
    %272 = arith.addf %268, %271 : vector<15x15xf32>
    %c29 = arith.constant 29 : index
    %273 = memref.load %arg4[%c29] : memref<36xf32, #tpu.memory_space<smem>>
    %274 = vector.broadcast %273 : f32 to vector<15x15xf32>
    %275 = arith.mulf %274, %143 : vector<15x15xf32>
    %276 = arith.addf %272, %275 : vector<15x15xf32>
    %c30 = arith.constant 30 : index
    %277 = memref.load %arg4[%c30] : memref<36xf32, #tpu.memory_space<smem>>
    %278 = vector.broadcast %277 : f32 to vector<15x15xf32>
    %279 = arith.mulf %278, %144 : vector<15x15xf32>
    %280 = arith.addf %276, %279 : vector<15x15xf32>
    %c31 = arith.constant 31 : index
    %281 = memref.load %arg4[%c31] : memref<36xf32, #tpu.memory_space<smem>>
    %282 = vector.broadcast %281 : f32 to vector<15x15xf32>
    %283 = arith.mulf %282, %145 : vector<15x15xf32>
    %284 = arith.addf %280, %283 : vector<15x15xf32>
    %c32 = arith.constant 32 : index
    %285 = memref.load %arg4[%c32] : memref<36xf32, #tpu.memory_space<smem>>
    %286 = vector.broadcast %285 : f32 to vector<15x15xf32>
    %287 = arith.mulf %286, %146 : vector<15x15xf32>
    %288 = arith.addf %284, %287 : vector<15x15xf32>
    %c33 = arith.constant 33 : index
    %289 = memref.load %arg4[%c33] : memref<36xf32, #tpu.memory_space<smem>>
    %290 = vector.broadcast %289 : f32 to vector<15x15xf32>
    %291 = arith.mulf %290, %147 : vector<15x15xf32>
    %292 = arith.addf %288, %291 : vector<15x15xf32>
    %c34 = arith.constant 34 : index
    %293 = memref.load %arg4[%c34] : memref<36xf32, #tpu.memory_space<smem>>
    %294 = vector.broadcast %293 : f32 to vector<15x15xf32>
    %295 = arith.mulf %294, %148 : vector<15x15xf32>
    %296 = arith.addf %292, %295 : vector<15x15xf32>
    %c35 = arith.constant 35 : index
    %297 = memref.load %arg4[%c35] : memref<36xf32, #tpu.memory_space<smem>>
    %298 = vector.broadcast %297 : f32 to vector<15x15xf32>
    %299 = arith.mulf %298, %149 : vector<15x15xf32>
    %300 = arith.addf %296, %299 : vector<15x15xf32>
    %c2_63 = arith.constant 2 : index
    %301 = memref.load %arg5[%c2_63] : memref<3xf32, #tpu.memory_space<smem>>
    %302 = vector.broadcast %301 : f32 to vector<15x15xf32>
    %303 = arith.addf %300, %302 : vector<15x15xf32>
    %cst_64 = arith.constant 0.000000e+00 : f32
    %304 = vector.broadcast %cst_64 : f32 to vector<15x15xf32>
    %305 = arith.maximumf %303, %304 : vector<15x15xf32>
    %c0_65 = arith.constant 0 : index
    %306 = memref.load %arg6[%c0_65] : memref<12xf32, #tpu.memory_space<smem>>
    %307 = vector.extract_strided_slice %201 {offsets = [0, 0], sizes = [13, 13], strides = [1, 1]} : vector<15x15xf32> to vector<13x13xf32>
    %308 = vector.broadcast %306 : f32 to vector<13x13xf32>
    %309 = arith.mulf %308, %307 : vector<13x13xf32>
    %c1_66 = arith.constant 1 : index
    %310 = memref.load %arg6[%c1_66] : memref<12xf32, #tpu.memory_space<smem>>
    %311 = vector.extract_strided_slice %201 {offsets = [0, 2], sizes = [13, 13], strides = [1, 1]} : vector<15x15xf32> to vector<13x13xf32>
    %312 = vector.broadcast %310 : f32 to vector<13x13xf32>
    %313 = arith.mulf %312, %311 : vector<13x13xf32>
    %314 = arith.addf %309, %313 : vector<13x13xf32>
    %c2_67 = arith.constant 2 : index
    %315 = memref.load %arg6[%c2_67] : memref<12xf32, #tpu.memory_space<smem>>
    %316 = vector.extract_strided_slice %201 {offsets = [2, 0], sizes = [13, 13], strides = [1, 1]} : vector<15x15xf32> to vector<13x13xf32>
    %317 = vector.broadcast %315 : f32 to vector<13x13xf32>
    %318 = arith.mulf %317, %316 : vector<13x13xf32>
    %319 = arith.addf %314, %318 : vector<13x13xf32>
    %c3_68 = arith.constant 3 : index
    %320 = memref.load %arg6[%c3_68] : memref<12xf32, #tpu.memory_space<smem>>
    %321 = vector.extract_strided_slice %201 {offsets = [2, 2], sizes = [13, 13], strides = [1, 1]} : vector<15x15xf32> to vector<13x13xf32>
    %322 = vector.broadcast %320 : f32 to vector<13x13xf32>
    %323 = arith.mulf %322, %321 : vector<13x13xf32>
    %324 = arith.addf %319, %323 : vector<13x13xf32>
    %c4_69 = arith.constant 4 : index
    %325 = memref.load %arg6[%c4_69] : memref<12xf32, #tpu.memory_space<smem>>
    %326 = vector.extract_strided_slice %253 {offsets = [0, 0], sizes = [13, 13], strides = [1, 1]} : vector<15x15xf32> to vector<13x13xf32>
    %327 = vector.broadcast %325 : f32 to vector<13x13xf32>
    %328 = arith.mulf %327, %326 : vector<13x13xf32>
    %329 = arith.addf %324, %328 : vector<13x13xf32>
    %c5_70 = arith.constant 5 : index
    %330 = memref.load %arg6[%c5_70] : memref<12xf32, #tpu.memory_space<smem>>
    %331 = vector.extract_strided_slice %253 {offsets = [0, 2], sizes = [13, 13], strides = [1, 1]} : vector<15x15xf32> to vector<13x13xf32>
    %332 = vector.broadcast %330 : f32 to vector<13x13xf32>
    %333 = arith.mulf %332, %331 : vector<13x13xf32>
    %334 = arith.addf %329, %333 : vector<13x13xf32>
    %c6_71 = arith.constant 6 : index
    %335 = memref.load %arg6[%c6_71] : memref<12xf32, #tpu.memory_space<smem>>
    %336 = vector.extract_strided_slice %253 {offsets = [2, 0], sizes = [13, 13], strides = [1, 1]} : vector<15x15xf32> to vector<13x13xf32>
    %337 = vector.broadcast %335 : f32 to vector<13x13xf32>
    %338 = arith.mulf %337, %336 : vector<13x13xf32>
    %339 = arith.addf %334, %338 : vector<13x13xf32>
    %c7_72 = arith.constant 7 : index
    %340 = memref.load %arg6[%c7_72] : memref<12xf32, #tpu.memory_space<smem>>
    %341 = vector.extract_strided_slice %253 {offsets = [2, 2], sizes = [13, 13], strides = [1, 1]} : vector<15x15xf32> to vector<13x13xf32>
    %342 = vector.broadcast %340 : f32 to vector<13x13xf32>
    %343 = arith.mulf %342, %341 : vector<13x13xf32>
    %344 = arith.addf %339, %343 : vector<13x13xf32>
    %c8_73 = arith.constant 8 : index
    %345 = memref.load %arg6[%c8_73] : memref<12xf32, #tpu.memory_space<smem>>
    %346 = vector.extract_strided_slice %305 {offsets = [0, 0], sizes = [13, 13], strides = [1, 1]} : vector<15x15xf32> to vector<13x13xf32>
    %347 = vector.broadcast %345 : f32 to vector<13x13xf32>
    %348 = arith.mulf %347, %346 : vector<13x13xf32>
    %349 = arith.addf %344, %348 : vector<13x13xf32>
    %c9_74 = arith.constant 9 : index
    %350 = memref.load %arg6[%c9_74] : memref<12xf32, #tpu.memory_space<smem>>
    %351 = vector.extract_strided_slice %305 {offsets = [0, 2], sizes = [13, 13], strides = [1, 1]} : vector<15x15xf32> to vector<13x13xf32>
    %352 = vector.broadcast %350 : f32 to vector<13x13xf32>
    %353 = arith.mulf %352, %351 : vector<13x13xf32>
    %354 = arith.addf %349, %353 : vector<13x13xf32>
    %c10_75 = arith.constant 10 : index
    %355 = memref.load %arg6[%c10_75] : memref<12xf32, #tpu.memory_space<smem>>
    %356 = vector.extract_strided_slice %305 {offsets = [2, 0], sizes = [13, 13], strides = [1, 1]} : vector<15x15xf32> to vector<13x13xf32>
    %357 = vector.broadcast %355 : f32 to vector<13x13xf32>
    %358 = arith.mulf %357, %356 : vector<13x13xf32>
    %359 = arith.addf %354, %358 : vector<13x13xf32>
    %c11_76 = arith.constant 11 : index
    %360 = memref.load %arg6[%c11_76] : memref<12xf32, #tpu.memory_space<smem>>
    %361 = vector.extract_strided_slice %305 {offsets = [2, 2], sizes = [13, 13], strides = [1, 1]} : vector<15x15xf32> to vector<13x13xf32>
    %362 = vector.broadcast %360 : f32 to vector<13x13xf32>
    %363 = arith.mulf %362, %361 : vector<13x13xf32>
    %364 = arith.addf %359, %363 : vector<13x13xf32>
    %c0_77 = arith.constant 0 : index
    %365 = memref.load %arg7[%c0_77] : memref<1xf32, #tpu.memory_space<smem>>
    %366 = vector.broadcast %365 : f32 to vector<13x13xf32>
    %367 = arith.addf %364, %366 : vector<13x13xf32>
    %368 = math.absf %367 : vector<13x13xf32>
    %cst_78 = arith.constant 0.000000e+00 : f32
    %369 = vector.broadcast %cst_78 : f32 to vector<13x13xf32>
    %370 = arith.subf %369, %368 : vector<13x13xf32>
    %371 = math.exp %370 : vector<13x13xf32>
    %cst_79 = arith.constant 0.000000e+00 : f32
    %372 = vector.broadcast %cst_79 : f32 to vector<13x13xf32>
    %373 = arith.cmpf oge, %367, %372 : vector<13x13xf32>
    %cst_80 = arith.constant 1.000000e+00 : f32
    %374 = vector.broadcast %cst_80 : f32 to vector<13x13xf32>
    %375 = arith.select %373, %374, %371 : vector<13x13xi1>, vector<13x13xf32>
    %cst_81 = arith.constant 1.000000e+00 : f32
    %376 = vector.broadcast %cst_81 : f32 to vector<13x13xf32>
    %377 = arith.addf %376, %371 : vector<13x13xf32>
    %378 = arith.divf %375, %377 : vector<13x13xf32>
    %c0_82 = arith.constant 0 : index
    %c0_83 = arith.constant 0 : index
    %c0_84 = arith.constant 0 : index
    %379 = vector.load %arg8[%c0_82, %c0_83, %c0_84] : memref<1x13x13xf32, #tpu.memory_space<vmem>>, vector<1x13x13xf32>
    %380 = vector.shape_cast %379 : vector<1x13x13xf32> to vector<13x13xf32>
    %381 = vector.shape_cast %378 : vector<13x13xf32> to vector<1x13x13xf32>
    tpu.vector_store %arg8[%c0_82, %c0_83, %c0_84], %381 {strides = array<i32>} : memref<1x13x13xf32, #tpu.memory_space<vmem>>, vector<1x13x13xf32>,
    return
  }
  func.func @transform_0(%arg0: i32) -> (i32, i32, i32) {
    %c0_i32 = arith.constant 0 : i32
    %c0_i32_0 = arith.constant 0 : i32
    %c0_i32_1 = arith.constant 0 : i32
    return %arg0, %c0_i32, %c0_i32_0 : i32, i32, i32
  }
  func.func @transform_1(%arg0: i32) -> i32 {
    %c0_i32 = arith.constant 0 : i32
    %c0_i32_0 = arith.constant 0 : i32
    return %c0_i32 : i32
  }
  func.func @transform_2(%arg0: i32) -> i32 {
    %c0_i32 = arith.constant 0 : i32
    %c0_i32_0 = arith.constant 0 : i32
    return %c0_i32 : i32
  }
  func.func @transform_3(%arg0: i32) -> i32 {
    %c0_i32 = arith.constant 0 : i32
    %c0_i32_0 = arith.constant 0 : i32
    return %c0_i32 : i32
  }
  func.func @transform_4(%arg0: i32) -> i32 {
    %c0_i32 = arith.constant 0 : i32
    %c0_i32_0 = arith.constant 0 : i32
    return %c0_i32 : i32
  }
  func.func @transform_5(%arg0: i32) -> i32 {
    %c0_i32 = arith.constant 0 : i32
    %c0_i32_0 = arith.constant 0 : i32
    return %c0_i32 : i32
  }
  func.func @transform_6(%arg0: i32) -> i32 {
    %c0_i32 = arith.constant 0 : i32
    %c0_i32_0 = arith.constant 0 : i32
    return %c0_i32 : i32
  }
  func.func @transform_7(%arg0: i32) -> (i32, i32, i32) {
    %c0_i32 = arith.constant 0 : i32
    %c0_i32_0 = arith.constant 0 : i32
    %c0_i32_1 = arith.constant 0 : i32
    return %arg0, %c0_i32, %c0_i32_0 : i32, i32, i32
  }
}

</mosaic_0001>

<llo_original>
// kernel: trained_cnn_forward.1
$region0: #{trained_cnn_forward.1}
  #allocation0 [shape = 'u32[]', space=smem, size = 0x4, offset = 0x4, fixed_abs, tag = 'smem constant byte address 0x4 - core index']
  #allocation1 [shape = 'u32[144,128]{1,0:T(1,128)}', space=vmem, size = 0x12000, scoped, tag = 'internal scratch']
  #allocation2 [shape = 'f32[1]{0:T(128)S(6)}', space=smem, size = 0x200, scoped, tag = 'scoped memory for trained_cnn_forward.1']
  %s0 = inlined_call_operand.vmem [shape: f32[2,18,18], index: 0, kind: input, shape index: {}]
  %s1 = inlined_call_operand.vmem [shape: f32[27], index: 1, kind: input, shape index: {}]
  %s2 = inlined_call_operand.vmem [shape: f32[3], index: 2, kind: input, shape index: {}]
  %s3 = inlined_call_operand.vmem [shape: f32[36], index: 3, kind: input, shape index: {}]
  %s4 = inlined_call_operand.vmem [shape: f32[3], index: 4, kind: input, shape index: {}]
  %s5 = inlined_call_operand.vmem [shape: f32[12], index: 5, kind: input, shape index: {}]
  %s6 = inlined_call_operand.<no memory space> [shape: f32[1], index: 6, kind: input, shape index: {}]
  %s7 = inlined_call_operand.vmem [shape: f32[2,13,13], index: 7, kind: output, shape index: {}]
  %s8 = sld [smem:[#allocation0]]
  $region81: #{trained_cnn_forward.1} parent=0
    _
  %s10 = ssub.s32 1, %s8
  %s11 = scalar_select 0, %s10, %s8
  %12 = sst [smem:[#allocation2]] %s6
  $region1: #{trained_cnn_forward.1} parent=0
    #allocation3 [shape = 'u8[512]{0}', space=smem, size = 0x200, scoped, tag = 'input window, operand 1, single buffered']
    #allocation4 [shape = 's32[2]{0}', space=sflag, size = 0x8, scoped, tag = 'scoped memory for trained_cnn_forward.1']
    #allocation5 [shape = 'u8[512]{0}', space=smem, size = 0x200, scoped, tag = 'input window, operand 2, single buffered']
    #allocation6 [shape = 's32[1]{0}', space=sflag, size = 0x4, scoped, tag = 'scoped memory for trained_cnn_forward.1']
    #allocation7 [shape = 'u8[512]{0}', space=smem, size = 0x200, scoped, tag = 'input window, operand 3, single buffered']
    #allocation8 [shape = 'u8[512]{0}', space=smem, size = 0x200, scoped, tag = 'input window, operand 4, single buffered']
    #allocation9 [shape = 's32[1]{0}', space=sflag, size = 0x4, scoped, tag = 'scoped memory for trained_cnn_forward.1']
    #allocation10 [shape = 'u8[512]{0}', space=smem, size = 0x200, scoped, tag = 'input window, operand 5, single buffered']
    %13 = vsyncpa [#allocation4], 0
    %14 = vsyncpa [#allocation6], 0
    %15 = vsyncpa [#allocation9], 0
    loop: start=0, step=1, limit=4
    $region2: #{trained_cnn_forward.1} parent=1 // loop_pre_header
      _
    $region3: #{trained_cnn_forward.1} parent=1 // loop_header
      %s17 = sphi 0, %s21
      %p18 = scmp.ge.s32.totalorder %s17, 4
      %s27 = sphi 0, %s29
      %s30 = sphi 0, %s27
      %s31 = sphi 0, %s30
      %s47 = sphi 0, %s31
      %s51 = sphi 0, %s51
      %s53 = sphi 0, %s51
      %s54 = sphi 0, %s53
      %s68 = sphi 0, %s54
      %s72 = sphi 0, %s72
      %s74 = sphi 0, %s72
      %s75 = sphi 0, %s74
      %s89 = sphi 0, %s75
      %s93 = sphi 0, %s93
      %s95 = sphi 0, %s93
      %s96 = sphi 0, %s95
      %s110 = sphi 0, %s96
      %s114 = sphi 0, %s114
      %s116 = sphi 0, %s114
      %s117 = sphi 0, %s116
      %s131 = sphi 0, %s117
      %s135 = sphi 0, %s135
      %s137 = sphi 0, %s135
      %s138 = sphi 0, %s137
      %s152 = sphi 0, %s138
      %s156 = sphi 0, %s156
      %s158 = sphi 0, %s156
      %s159 = sphi 0, %s158
      %s173 = sphi 0, %s159
      %s179 = sphi 0, %s181
      %s182 = sphi 0, %s179
      %s183 = sphi 0, %s182
      %s199 = sphi 0, %s183
    $region4: #{trained_cnn_forward.1} parent=1 // loop_header_branch
      %20 = sbr.rel (%p18) target = $region8
    $region5: #{trained_cnn_forward.1} parent=1 // loop_body
      %s22 = ssub.s32 %s17, 1
      %s23 = ssub.s32 %s17, 2
      %s24 = sadd.s32 %s17, 1
      %s25 = ssub.s32 %s17, %s24
      %p26 = scmp.eq.s32.totalorder %s25, 0
      %s28 = sadd.s32 %s27, 1
      %s29 = scalar_select %p26, %s27, %s28
      %p32 = pneg %p26
      %p33 = scmp.eq.s32.totalorder %s17, 1
      %p34 = por %p32, %p33
      %p35 = scmp.ne.s32.totalorder %s27, %s30
      %p36 = scmp.eq.s32.totalorder %s17, 0
      %p37 = por %p35, %p36
      %p38 = scmp.ne.s32.totalorder %s27, %s30
      %p39 = scmp.eq.s32.totalorder %s22, 1
      %p40 = por %p38, %p39
      %p41 = scmp.ne.s32.totalorder %s30, %s31
      %p42 = scmp.eq.s32.totalorder %s22, 0
      %p43 = por %p41, %p42
      %p44 = scmp.ne.s32.totalorder %s30, %s31
      %p45 = scmp.eq.s32.totalorder %s23, 1
      %p46 = por %p44, %p45
      %p48 = scmp.ne.s32.totalorder %s31, %s47
      %p49 = scmp.eq.s32.totalorder %s23, 0
      %p50 = por %p48, %p49
      %s52 = sadd.s32 %s51, 1
      %p55 = scmp.eq.s32.totalorder %s17, 1
      %p56 = scmp.ne.s32.totalorder %s51, %s53
      %p57 = scmp.eq.s32.totalorder %s17, 0
      %p58 = por %p56, %p57
      %p59 = scmp.ne.s32.totalorder %s51, %s53
      %p60 = scmp.eq.s32.totalorder %s22, 1
      %p61 = por %p59, %p60
      %p62 = scmp.ne.s32.totalorder %s53, %s54
      %p63 = scmp.eq.s32.totalorder %s22, 0
      %p64 = por %p62, %p63
      %p65 = scmp.ne.s32.totalorder %s53, %s54
      %p66 = scmp.eq.s32.totalorder %s23, 1
      %p67 = por %p65, %p66
      %p69 = scmp.ne.s32.totalorder %s54, %s68
      %p70 = scmp.eq.s32.totalorder %s23, 0
      %p71 = por %p69, %p70
      %s73 = sadd.s32 %s72, 1
      %p76 = scmp.eq.s32.totalorder %s17, 1
      %p77 = scmp.ne.s32.totalorder %s72, %s74
      %p78 = scmp.eq.s32.totalorder %s17, 0
      %p79 = por %p77, %p78
      %p80 = scmp.ne.s32.totalorder %s72, %s74
      %p81 = scmp.eq.s32.totalorder %s22, 1
      %p82 = por %p80, %p81
      %p83 = scmp.ne.s32.totalorder %s74, %s75
      %p84 = scmp.eq.s32.totalorder %s22, 0
      %p85 = por %p83, %p84
      %p86 = scmp.ne.s32.totalorder %s74, %s75
      %p87 = scmp.eq.s32.totalorder %s23, 1
      %p88 = por %p86, %p87
      %p90 = scmp.ne.s32.totalorder %s75, %s89
      %p91 = scmp.eq.s32.totalorder %s23, 0
      %p92 = por %p90, %p91
      %s94 = sadd.s32 %s93, 1
      %p97 = scmp.eq.s32.totalorder %s17, 1
      %p98 = scmp.ne.s32.totalorder %s93, %s95
      %p99 = scmp.eq.s32.totalorder %s17, 0
      %p100 = por %p98, %p99
      %p101 = scmp.ne.s32.totalorder %s93, %s95
      %p102 = scmp.eq.s32.totalorder %s22, 1
      %p103 = por %p101, %p102
      %p104 = scmp.ne.s32.totalorder %s95, %s96
      %p105 = scmp.eq.s32.totalorder %s22, 0
      %p106 = por %p104, %p105
      %p107 = scmp.ne.s32.totalorder %s95, %s96
      %p108 = scmp.eq.s32.totalorder %s23, 1
      %p109 = por %p107, %p108
      %p111 = scmp.ne.s32.totalorder %s96, %s110
      %p112 = scmp.eq.s32.totalorder %s23, 0
      %p113 = por %p111, %p112
      %s115 = sadd.s32 %s114, 1
      %p118 = scmp.eq.s32.totalorder %s17, 1
      %p119 = scmp.ne.s32.totalorder %s114, %s116
      %p120 = scmp.eq.s32.totalorder %s17, 0
      %p121 = por %p119, %p120
      %p122 = scmp.ne.s32.totalorder %s114, %s116
      %p123 = scmp.eq.s32.totalorder %s22, 1
      %p124 = por %p122, %p123
      %p125 = scmp.ne.s32.totalorder %s116, %s117
      %p126 = scmp.eq.s32.totalorder %s22, 0
      %p127 = por %p125, %p126
      %p128 = scmp.ne.s32.totalorder %s116, %s117
      %p129 = scmp.eq.s32.totalorder %s23, 1
      %p130 = por %p128, %p129
      %p132 = scmp.ne.s32.totalorder %s117, %s131
      %p133 = scmp.eq.s32.totalorder %s23, 0
      %p134 = por %p132, %p133
      %s136 = sadd.s32 %s135, 1
      %p139 = scmp.eq.s32.totalorder %s17, 1
      %p140 = scmp.ne.s32.totalorder %s135, %s137
      %p141 = scmp.eq.s32.totalorder %s17, 0
      %p142 = por %p140, %p141
      %p143 = scmp.ne.s32.totalorder %s135, %s137
      %p144 = scmp.eq.s32.totalorder %s22, 1
      %p145 = por %p143, %p144
      %p146 = scmp.ne.s32.totalorder %s137, %s138
      %p147 = scmp.eq.s32.totalorder %s22, 0
      %p148 = por %p146, %p147
      %p149 = scmp.ne.s32.totalorder %s137, %s138
      %p150 = scmp.eq.s32.totalorder %s23, 1
      %p151 = por %p149, %p150
      %p153 = scmp.ne.s32.totalorder %s138, %s152
      %p154 = scmp.eq.s32.totalorder %s23, 0
      %p155 = por %p153, %p154
      %s157 = sadd.s32 %s156, 1
      %p160 = scmp.eq.s32.totalorder %s17, 1
      %p161 = scmp.ne.s32.totalorder %s156, %s158
      %p162 = scmp.eq.s32.totalorder %s17, 0
      %p163 = por %p161, %p162
      %p164 = scmp.ne.s32.totalorder %s156, %s158
      %p165 = scmp.eq.s32.totalorder %s22, 1
      %p166 = por %p164, %p165
      %p167 = scmp.ne.s32.totalorder %s158, %s159
      %p168 = scmp.eq.s32.totalorder %s22, 0
      %p169 = por %p167, %p168
      %p170 = scmp.ne.s32.totalorder %s158, %s159
      %p171 = scmp.eq.s32.totalorder %s23, 1
      %p172 = por %p170, %p171
      %p174 = scmp.ne.s32.totalorder %s159, %s173
      %p175 = scmp.eq.s32.totalorder %s23, 0
      %p176 = por %p174, %p175
      %s177 = ssub.s32 %s17, %s24
      %p178 = scmp.eq.s32.totalorder %s177, 0
      %s180 = sadd.s32 %s179, 1
      %s181 = scalar_select %p178, %s179, %s180
      %p184 = pneg %p178
      %p185 = scmp.eq.s32.totalorder %s17, 1
      %p186 = por %p184, %p185
      %p187 = scmp.ne.s32.totalorder %s179, %s182
      %p188 = scmp.eq.s32.totalorder %s17, 0
      %p189 = por %p187, %p188
      %p190 = scmp.ne.s32.totalorder %s179, %s182
      %p191 = scmp.eq.s32.totalorder %s22, 1
      %p192 = por %p190, %p191
      %p193 = scmp.ne.s32.totalorder %s182, %s183
      %p194 = scmp.eq.s32.totalorder %s22, 0
      %p195 = por %p193, %p194
      %p196 = scmp.ne.s32.totalorder %s182, %s183
      %p197 = scmp.eq.s32.totalorder %s23, 1
      %p198 = por %p196, %p197
      %p200 = scmp.ne.s32.totalorder %s183, %s199
      %p201 = scmp.eq.s32.totalorder %s23, 0
      %p202 = por %p200, %p201
      %p203 = scmp.le.s32.totalorder 1, %s17
      %p204 = scmp.lt.s32.totalorder %s17, 3
      %p205 = pnand %p203, %p204
      %p206 = pneg %p205
      // Predicated region
      $region9: #{trained_cnn_forward.1} parent=5 // pred_check
        _
      $region10: #{trained_cnn_forward.1} parent=5 // pred_check_branch
        %208 = sbr.rel (%p205) target = $region12
      $region11: #{trained_cnn_forward.1} parent=5 // pred_region
        %s209 = ssub.s32 %s17, 1
        // Predicated region
        $region13: #{trained_cnn_forward.1} parent=11 // pred_check
          %p210 = pneg %p64
        $region14: #{trained_cnn_forward.1} parent=11 // pred_check_branch
          %212 = sbr.rel (%p210) target = $region16
        $region15: #{trained_cnn_forward.1} parent=11 // pred_region
          %s214 = ssub.s32 16, 16
          %215 = vsyncadd [#allocation4], %s214
          %s217 = sshll.u32 %s1, 4
          %s218 = int_to_ptr.vmem [resolvable:$true] %s217
          %220 = dma.vmem_to_smem %s218, 16, [#allocation3], [#allocation4]
        $region16: #{trained_cnn_forward.1} parent=11 // pred_fallthru
          _
        // Predicated region
        $region17: #{trained_cnn_forward.1} parent=11 // pred_check
          %p221 = pneg %p85
        $region18: #{trained_cnn_forward.1} parent=11 // pred_check_branch
          %223 = sbr.rel (%p221) target = $region20
        $region19: #{trained_cnn_forward.1} parent=11 // pred_region
          %s225 = ssub.s32 16, 16
          %226 = vsyncadd [#allocation6], %s225
          %s228 = sshll.u32 %s2, 4
          %s229 = int_to_ptr.vmem [resolvable:$true] %s228
          %231 = dma.vmem_to_smem %s229, 16, [#allocation5], [#allocation6]
        $region20: #{trained_cnn_forward.1} parent=11 // pred_fallthru
          _
        // Predicated region
        $region21: #{trained_cnn_forward.1} parent=11 // pred_check
          %p232 = pneg %p106
        $region22: #{trained_cnn_forward.1} parent=11 // pred_check_branch
          %234 = sbr.rel (%p232) target = $region24
        $region23: #{trained_cnn_forward.1} parent=11 // pred_region
          %s236 = ssub.s32 16, 16
          %237 = vsyncadd [#allocation6], %s236
          %s239 = sshll.u32 %s3, 4
          %s240 = int_to_ptr.vmem [resolvable:$true] %s239
          %242 = dma.vmem_to_smem %s240, 16, [#allocation7], [#allocation6]
        $region24: #{trained_cnn_forward.1} parent=11 // pred_fallthru
          _
        // Predicated region
        $region25: #{trained_cnn_forward.1} parent=11 // pred_check
          %p243 = pneg %p127
        $region26: #{trained_cnn_forward.1} parent=11 // pred_check_branch
          %245 = sbr.rel (%p243) target = $region28
        $region27: #{trained_cnn_forward.1} parent=11 // pred_region
          %s247 = ssub.s32 16, 16
          %248 = vsyncadd [#allocation9], %s247
          %s250 = sshll.u32 %s4, 4
          %s251 = int_to_ptr.vmem [resolvable:$true] %s250
          %253 = dma.vmem_to_smem %s251, 16, [#allocation8], [#allocation9]
        $region28: #{trained_cnn_forward.1} parent=11 // pred_fallthru
          _
        // Predicated region
        $region29: #{trained_cnn_forward.1} parent=11 // pred_check
          %p254 = pneg %p148
        $region30: #{trained_cnn_forward.1} parent=11 // pred_check_branch
          %256 = sbr.rel (%p254) target = $region32
        $region31: #{trained_cnn_forward.1} parent=11 // pred_region
          %s258 = ssub.s32 16, 16
          %259 = vsyncadd [#allocation9], %s258
          %s261 = sshll.u32 %s5, 4
          %s262 = int_to_ptr.vmem [resolvable:$true] %s261
          %264 = dma.vmem_to_smem %s262, 16, [#allocation10], [#allocation9]
        $region32: #{trained_cnn_forward.1} parent=11 // pred_fallthru
          _
        // Predicated region
        $region33: #{trained_cnn_forward.1} parent=11 // pred_check
          %p265 = pneg %p169
        $region34: #{trained_cnn_forward.1} parent=11 // pred_check_branch
          %267 = sbr.rel (%p265) target = $region36
        $region35: #{trained_cnn_forward.1} parent=11 // pred_region
          _
        $region36: #{trained_cnn_forward.1} parent=11 // pred_fallthru
          _
      $region12: #{trained_cnn_forward.1} parent=5 // pred_fallthru
        _
      %p268 = scmp.lt.s32.totalorder %s17, 2
      // Predicated region
      $region37: #{trained_cnn_forward.1} parent=5 // pred_check
        %p269 = pneg %p268
      $region38: #{trained_cnn_forward.1} parent=5 // pred_check_branch
        %271 = sbr.rel (%p269) target = $region40
      $region39: #{trained_cnn_forward.1} parent=5 // pred_region
        // Predicated region
        $region41: #{trained_cnn_forward.1} parent=39 // pred_check
          %p272 = pneg %p37
        $region42: #{trained_cnn_forward.1} parent=39 // pred_check_branch
          %274 = sbr.rel (%p272) target = $region44
        $region43: #{trained_cnn_forward.1} parent=39 // pred_region
          %p275 = scmp.lt.s32.totalorder %s17, 1
          %s276 = scalar_select %p275, %s17, 1
          %s277 = smul.addr %s276, 3
          %s278 = smul.addr %s277, 8
          %s279 = scalar_lea.vmem %s0, %s278
        $region44: #{trained_cnn_forward.1} parent=39 // pred_fallthru
          _
      $region40: #{trained_cnn_forward.1} parent=5 // pred_fallthru
        _
      %p280 = scmp.le.s32.totalorder 1, %s17
      %p281 = scmp.lt.s32.totalorder %s17, 3
      %p282 = pnand %p280, %p281
      %p283 = pneg %p282
      // Predicated region
      $region45: #{trained_cnn_forward.1} parent=5 // pred_check
        _
      $region46: #{trained_cnn_forward.1} parent=5 // pred_check_branch
        %285 = sbr.rel (%p282) target = $region48
      $region47: #{trained_cnn_forward.1} parent=5 // pred_region
        %s286 = ssub.s32 %s17, 1
        // Predicated region
        $region49: #{trained_cnn_forward.1} parent=47 // pred_check
          %p287 = pneg %p64
        $region50: #{trained_cnn_forward.1} parent=47 // pred_check_branch
          %289 = sbr.rel (%p287) target = $region52
        $region51: #{trained_cnn_forward.1} parent=47 // pred_region
          %290 = dma.done [#allocation4], 16
        $region52: #{trained_cnn_forward.1} parent=47 // pred_fallthru
          _
        // Predicated region
        $region53: #{trained_cnn_forward.1} parent=47 // pred_check
          %p291 = pneg %p85
        $region54: #{trained_cnn_forward.1} parent=47 // pred_check_branch
          %293 = sbr.rel (%p291) target = $region56
        $region55: #{trained_cnn_forward.1} parent=47 // pred_region
          %294 = dma.done [#allocation6], 16
        $region56: #{trained_cnn_forward.1} parent=47 // pred_fallthru
          _
        // Predicated region
        $region57: #{trained_cnn_forward.1} parent=47 // pred_check
          %p295 = pneg %p106
        $region58: #{trained_cnn_forward.1} parent=47 // pred_check_branch
          %297 = sbr.rel (%p295) target = $region60
        $region59: #{trained_cnn_forward.1} parent=47 // pred_region
          %298 = dma.done [#allocation6], 16
        $region60: #{trained_cnn_forward.1} parent=47 // pred_fallthru
          _
        // Predicated region
        $region61: #{trained_cnn_forward.1} parent=47 // pred_check
          %p299 = pneg %p127
        $region62: #{trained_cnn_forward.1} parent=47 // pred_check_branch
          %301 = sbr.rel (%p299) target = $region64
        $region63: #{trained_cnn_forward.1} parent=47 // pred_region
          %302 = dma.done [#allocation9], 16
        $region64: #{trained_cnn_forward.1} parent=47 // pred_fallthru
          _
        // Predicated region
        $region65: #{trained_cnn_forward.1} parent=47 // pred_check
          %p303 = pneg %p148
        $region66: #{trained_cnn_forward.1} parent=47 // pred_check_branch
          %305 = sbr.rel (%p303) target = $region68
        $region67: #{trained_cnn_forward.1} parent=47 // pred_region
          %306 = dma.done [#allocation9], 16
        $region68: #{trained_cnn_forward.1} parent=47 // pred_fallthru
          _
        %307 = sfence
        %p308 = scmp.lt.s32.totalorder %s22, 1
        %s309 = scalar_select %p308, %s22, 1
        %s310 = smul.addr %s309, 3
        %s311 = smul.addr %s310, 8
        %s312 = scalar_lea.vmem %s0, %s311
        %p313 = pneg %p43
        %p314 = pneg %p40
        %p315 = pneg %p64
        %p316 = pneg %p61
        %p317 = pneg %p85
        %p318 = pneg %p82
        %p319 = pneg %p106
        %p320 = pneg %p103
        %p321 = pneg %p127
        %p322 = pneg %p124
        %p323 = pneg %p148
        %p324 = pneg %p145
        %p325 = pneg %p169
        %p326 = pneg %p166
        %p327 = pneg %p195
        %p328 = pneg %p192
        %p329 = scmp.lt.s32.totalorder %s22, 1
        %s330 = scalar_select %p329, %s22, 1
        %s331 = smul.addr %s330, 2
        %s332 = smul.addr %s331, 8
        %s333 = scalar_lea.vmem %s7, %s332
        %p334 = scmp.lt.s32.totalorder %s22, 1
        %s335 = scalar_select %p334, %s22, 1
        %s336 = smul.addr %s335, 3
        %s337 = smul.addr %s336, 8
        %s338 = scalar_lea.vmem %s0, %s337
        %p339 = scmp.lt.s32.totalorder %s22, 1
        %s340 = scalar_select %p339, %s22, 1
        %s341 = smul.addr %s340, 2
        %s342 = smul.addr %s341, 8
        %s343 = scalar_lea.vmem %s7, %s342
        %v344 = vld [vmem:[%s338] sm:$0xff]
        %v345 = vld [vmem:[%s338 + $0x8] sm:$0xff]
        %v346 = vld [vmem:[%s338 + $0x1] sm:$0xff]
        %v347 = vld [vmem:[%s338 + $0x9] sm:$0xff]
        %v348 = vld [vmem:[%s338 + $0x2] sm:$0xff]
        %v349 = vld [vmem:[%s338 + $0xa] sm:$0xff]
        %s350 = sld [smem:[#allocation3]]
        %v351 = vstv %s350
        %v352 = vmul.f32 %v351, %v344
        %v353 = vmul.f32 %v351, %v345
        %s354 = sld [smem:[#allocation3 + $0x1]]
        %v355 = vstv %s354
        %v356 = vmul.f32 %v355, %v344
        %v357 = vmul.f32 %v355, %v345
        %360 = vrot.lane.b32.xlu0 %v356, 127
        %v361 = vpop.permute.xlu0 %360
        %362 = vrot.lane.b32.xlu0 %v357, 127
        %v363 = vpop.permute.xlu0 %362
        %v366 = vadd.f32 %v352, %v361
        %v367 = vadd.f32 %v353, %v363
        %s368 = sld [smem:[#allocation3 + $0x2]]
        %v369 = vstv %s368
        %v370 = vmul.f32 %v369, %v344
        %v371 = vmul.f32 %v369, %v345
        %374 = vrot.lane.b32.xlu0 %v370, 126
        %v375 = vpop.permute.xlu0 %374
        %376 = vrot.lane.b32.xlu0 %v371, 126
        %v377 = vpop.permute.xlu0 %376
        %v380 = vadd.f32 %v366, %v375
        %v381 = vadd.f32 %v367, %v377
        %s382 = sld [smem:[#allocation3 + $0x3]]
        %v383 = vstv %s382
        %v384 = vmul.f32 %v383, %v346
        %v385 = vmul.f32 %v383, %v347
        %v386 = vadd.f32 %v380, %v384
        %v387 = vadd.f32 %v381, %v385
        %s388 = sld [smem:[#allocation3 + $0x4]]
        %v389 = vstv %s388
        %v390 = vmul.f32 %v389, %v346
        %v391 = vmul.f32 %v389, %v347
        %394 = vrot.lane.b32.xlu0 %v390, 127
        %v395 = vpop.permute.xlu0 %394
        %396 = vrot.lane.b32.xlu0 %v391, 127
        %v397 = vpop.permute.xlu0 %396
        %v400 = vadd.f32 %v386, %v395
        %v401 = vadd.f32 %v387, %v397
        %s402 = sld [smem:[#allocation3 + $0x5]]
        %v403 = vstv %s402
        %v404 = vmul.f32 %v403, %v346
        %v405 = vmul.f32 %v403, %v347
        %408 = vrot.lane.b32.xlu0 %v404, 126
        %v409 = vpop.permute.xlu0 %408
        %410 = vrot.lane.b32.xlu0 %v405, 126
        %v411 = vpop.permute.xlu0 %410
        %v414 = vadd.f32 %v400, %v409
        %v415 = vadd.f32 %v401, %v411
        %s416 = sld [smem:[#allocation3 + $0x6]]
        %v417 = vstv %s416
        %v418 = vmul.f32 %v417, %v348
        %v419 = vmul.f32 %v417, %v349
        %v420 = vadd.f32 %v414, %v418
        %v421 = vadd.f32 %v415, %v419
        %s422 = sld [smem:[#allocation3 + $0x7]]
        %v423 = vstv %s422
        %v424 = vmul.f32 %v423, %v348
        %v425 = vmul.f32 %v423, %v349
        %428 = vrot.lane.b32.xlu0 %v424, 127
        %v429 = vpop.permute.xlu0 %428
        %430 = vrot.lane.b32.xlu0 %v425, 127
        %v431 = vpop.permute.xlu0 %430
        %v434 = vadd.f32 %v420, %v429
        %v435 = vadd.f32 %v421, %v431
        %s436 = sld [smem:[#allocation3 + $0x8]]
        %v437 = vstv %s436
        %v438 = vmul.f32 %v437, %v348
        %v439 = vmul.f32 %v437, %v349
        %442 = vrot.lane.b32.xlu0 %v438, 126
        %v443 = vpop.permute.xlu0 %442
        %444 = vrot.lane.b32.xlu0 %v439, 126
        %v445 = vpop.permute.xlu0 %444
        %v448 = vadd.f32 %v434, %v443
        %v449 = vadd.f32 %v435, %v445
        %s450 = sld [smem:[#allocation5]]
        %v451 = vstv %s450
        %v452 = vadd.f32 %v448, %v451
        %v453 = vadd.f32 %v449, %v451
        %v454 = vmax.f32 %v452, 0.0
        %v455 = vmax.f32 %v453, 0.0
        %s456 = sld [smem:[#allocation3 + $0x9]]
        %v457 = vstv %s456
        %v458 = vmul.f32 %v457, %v344
        %v459 = vmul.f32 %v457, %v345
        %s460 = sld [smem:[#allocation3 + $0xa]]
        %v461 = vstv %s460
        %v462 = vmul.f32 %v461, %v344
        %v463 = vmul.f32 %v461, %v345
        %466 = vrot.lane.b32.xlu0 %v462, 127
        %v467 = vpop.permute.xlu0 %466
        %468 = vrot.lane.b32.xlu0 %v463, 127
        %v469 = vpop.permute.xlu0 %468
        %v472 = vadd.f32 %v458, %v467
        %v473 = vadd.f32 %v459, %v469
        %s474 = sld [smem:[#allocation3 + $0xb]]
        %v475 = vstv %s474
        %v476 = vmul.f32 %v475, %v344
        %v477 = vmul.f32 %v475, %v345
        %480 = vrot.lane.b32.xlu0 %v476, 126
        %v481 = vpop.permute.xlu0 %480
        %482 = vrot.lane.b32.xlu0 %v477, 126
        %v483 = vpop.permute.xlu0 %482
        %v486 = vadd.f32 %v472, %v481
        %v487 = vadd.f32 %v473, %v483
        %s488 = sld [smem:[#allocation3 + $0xc]]
        %v489 = vstv %s488
        %v490 = vmul.f32 %v489, %v346
        %v491 = vmul.f32 %v489, %v347
        %v492 = vadd.f32 %v486, %v490
        %v493 = vadd.f32 %v487, %v491
        %s494 = sld [smem:[#allocation3 + $0xd]]
        %v495 = vstv %s494
        %v496 = vmul.f32 %v495, %v346
        %v497 = vmul.f32 %v495, %v347
        %500 = vrot.lane.b32.xlu0 %v496, 127
        %v501 = vpop.permute.xlu0 %500
        %502 = vrot.lane.b32.xlu0 %v497, 127
        %v503 = vpop.permute.xlu0 %502
        %v506 = vadd.f32 %v492, %v501
        %v507 = vadd.f32 %v493, %v503
        %s508 = sld [smem:[#allocation3 + $0xe]]
        %v509 = vstv %s508
        %v510 = vmul.f32 %v509, %v346
        %v511 = vmul.f32 %v509, %v347
        %514 = vrot.lane.b32.xlu0 %v510, 126
        %v515 = vpop.permute.xlu0 %514
        %516 = vrot.lane.b32.xlu0 %v511, 126
        %v517 = vpop.permute.xlu0 %516
        %v520 = vadd.f32 %v506, %v515
        %v521 = vadd.f32 %v507, %v517
        %s522 = sld [smem:[#allocation3 + $0xf]]
        %v523 = vstv %s522
        %v524 = vmul.f32 %v523, %v348
        %v525 = vmul.f32 %v523, %v349
        %v526 = vadd.f32 %v520, %v524
        %v527 = vadd.f32 %v521, %v525
        %s528 = sld [smem:[#allocation3 + $0x10]]
        %v529 = vstv %s528
        %v530 = vmul.f32 %v529, %v348
        %v531 = vmul.f32 %v529, %v349
        %534 = vrot.lane.b32.xlu0 %v530, 127
        %v535 = vpop.permute.xlu0 %534
        %536 = vrot.lane.b32.xlu0 %v531, 127
        %v537 = vpop.permute.xlu0 %536
        %v540 = vadd.f32 %v526, %v535
        %v541 = vadd.f32 %v527, %v537
        %s542 = sld [smem:[#allocation3 + $0x11]]
        %v543 = vstv %s542
        %v544 = vmul.f32 %v543, %v348
        %v545 = vmul.f32 %v543, %v349
        %548 = vrot.lane.b32.xlu0 %v544, 126
        %v549 = vpop.permute.xlu0 %548
        %550 = vrot.lane.b32.xlu0 %v545, 126
        %v551 = vpop.permute.xlu0 %550
        %v554 = vadd.f32 %v540, %v549
        %v555 = vadd.f32 %v541, %v551
        %s556 = sld [smem:[#allocation5 + $0x1]]
        %v557 = vstv %s556
        %v558 = vadd.f32 %v554, %v557
        %v559 = vadd.f32 %v555, %v557
        %v560 = vmax.f32 %v558, 0.0
        %v561 = vmax.f32 %v559, 0.0
        %s562 = sld [smem:[#allocation3 + $0x12]]
        %v563 = vstv %s562
        %v564 = vmul.f32 %v563, %v344
        %v565 = vmul.f32 %v563, %v345
        %s566 = sld [smem:[#allocation3 + $0x13]]
        %v567 = vstv %s566
        %v568 = vmul.f32 %v567, %v344
        %v569 = vmul.f32 %v567, %v345
        %572 = vrot.lane.b32.xlu0 %v568, 127
        %v573 = vpop.permute.xlu0 %572
        %574 = vrot.lane.b32.xlu0 %v569, 127
        %v575 = vpop.permute.xlu0 %574
        %v578 = vadd.f32 %v564, %v573
        %v579 = vadd.f32 %v565, %v575
        %s580 = sld [smem:[#allocation3 + $0x14]]
        %v581 = vstv %s580
        %v582 = vmul.f32 %v581, %v344
        %v583 = vmul.f32 %v581, %v345
        %586 = vrot.lane.b32.xlu0 %v582, 126
        %v587 = vpop.permute.xlu0 %586
        %588 = vrot.lane.b32.xlu0 %v583, 126
        %v589 = vpop.permute.xlu0 %588
        %v592 = vadd.f32 %v578, %v587
        %v593 = vadd.f32 %v579, %v589
        %s594 = sld [smem:[#allocation3 + $0x15]]
        %v595 = vstv %s594
        %v596 = vmul.f32 %v595, %v346
        %v597 = vmul.f32 %v595, %v347
        %v598 = vadd.f32 %v592, %v596
        %v599 = vadd.f32 %v593, %v597
        %s600 = sld [smem:[#allocation3 + $0x16]]
        %v601 = vstv %s600
        %v602 = vmul.f32 %v601, %v346
        %v603 = vmul.f32 %v601, %v347
        %606 = vrot.lane.b32.xlu0 %v602, 127
        %v607 = vpop.permute.xlu0 %606
        %608 = vrot.lane.b32.xlu0 %v603, 127
        %v609 = vpop.permute.xlu0 %608
        %v612 = vadd.f32 %v598, %v607
        %v613 = vadd.f32 %v599, %v609
        %s614 = sld [smem:[#allocation3 + $0x17]]
        %v615 = vstv %s614
        %v616 = vmul.f32 %v615, %v346
        %v617 = vmul.f32 %v615, %v347
        %620 = vrot.lane.b32.xlu0 %v616, 126
        %v621 = vpop.permute.xlu0 %620
        %622 = vrot.lane.b32.xlu0 %v617, 126
        %v623 = vpop.permute.xlu0 %622
        %v626 = vadd.f32 %v612, %v621
        %v627 = vadd.f32 %v613, %v623
        %s628 = sld [smem:[#allocation3 + $0x18]]
        %v629 = vstv %s628
        %v630 = vmul.f32 %v629, %v348
        %v631 = vmul.f32 %v629, %v349
        %v632 = vadd.f32 %v626, %v630
        %v633 = vadd.f32 %v627, %v631
        %s634 = sld [smem:[#allocation3 + $0x19]]
        %v635 = vstv %s634
        %v636 = vmul.f32 %v635, %v348
        %v637 = vmul.f32 %v635, %v349
        %640 = vrot.lane.b32.xlu0 %v636, 127
        %v641 = vpop.permute.xlu0 %640
        %642 = vrot.lane.b32.xlu0 %v637, 127
        %v643 = vpop.permute.xlu0 %642
        %v646 = vadd.f32 %v632, %v641
        %v647 = vadd.f32 %v633, %v643
        %s648 = sld [smem:[#allocation3 + $0x1a]]
        %v649 = vstv %s648
        %v650 = vmul.f32 %v649, %v348
        %v651 = vmul.f32 %v649, %v349
        %654 = vrot.lane.b32.xlu0 %v650, 126
        %v655 = vpop.permute.xlu0 %654
        %656 = vrot.lane.b32.xlu0 %v651, 126
        %v657 = vpop.permute.xlu0 %656
        %v660 = vadd.f32 %v646, %v655
        %v661 = vadd.f32 %v647, %v657
        %s662 = sld [smem:[#allocation5 + $0x2]]
        %v663 = vstv %s662
        %v664 = vadd.f32 %v660, %v663
        %v665 = vadd.f32 %v661, %v663
        %v666 = vmax.f32 %v664, 0.0
        %v667 = vmax.f32 %v665, 0.0
        %s668 = sld [smem:[#allocation7]]
        %v669 = vstv %s668
        %v670 = vmul.f32 %v669, %v454
        %v671 = vmul.f32 %v669, %v455
        %s672 = sld [smem:[#allocation7 + $0x1]]
        %v673 = vstv %s672
        %v674 = vmul.f32 %v673, %v454
        %v675 = vmul.f32 %v673, %v455
        %678 = vrot.lane.b32.xlu0 %v674, 127
        %v679 = vpop.permute.xlu0 %678
        %680 = vrot.lane.b32.xlu0 %v675, 127
        %v681 = vpop.permute.xlu0 %680
        %v684 = vadd.f32 %v670, %v679
        %v685 = vadd.f32 %v671, %v681
        %s686 = sld [smem:[#allocation7 + $0x2]]
        %v687 = vstv %s686
        %v688 = vmul.f32 %v687, %v454
        %v689 = vmul.f32 %v687, %v455
        %vm692 = vcmask 1046528
        %v693 = vrot.slane %v688, 1
        %v694 = vrot.slane %v689, 1
        %v695 = vsel %vm692, %v693, %v694
        %v698 = vadd.f32 %v684, %v695
        %v699 = vadd.f32 %v685, %v694
        %s700 = sld [smem:[#allocation7 + $0x3]]
        %v701 = vstv %s700
        %v702 = vmul.f32 %v701, %v454
        %v703 = vmul.f32 %v701, %v455
        %v706 = vrot.slane %v702, 1
        %v707 = vrot.slane %v703, 1
        %v708 = vsel %vm692, %v706, %v707
        %709 = vrot.lane.b32.xlu0 %v708, 127
        %v710 = vpop.permute.xlu0 %709
        %711 = vrot.lane.b32.xlu0 %v707, 127
        %v712 = vpop.permute.xlu0 %711
        %v715 = vadd.f32 %v698, %v710
        %v716 = vadd.f32 %v699, %v712
        %s717 = sld [smem:[#allocation7 + $0x4]]
        %v718 = vstv %s717
        %v719 = vmul.f32 %v718, %v560
        %v720 = vmul.f32 %v718, %v561
        %v721 = vadd.f32 %v715, %v719
        %v722 = vadd.f32 %v716, %v720
        %s723 = sld [smem:[#allocation7 + $0x5]]
        %v724 = vstv %s723
        %v725 = vmul.f32 %v724, %v560
        %v726 = vmul.f32 %v724, %v561
        %729 = vrot.lane.b32.xlu0 %v725, 127
        %v730 = vpop.permute.xlu0 %729
        %731 = vrot.lane.b32.xlu0 %v726, 127
        %v732 = vpop.permute.xlu0 %731
        %v735 = vadd.f32 %v721, %v730
        %v736 = vadd.f32 %v722, %v732
        %s737 = sld [smem:[#allocation7 + $0x6]]
        %v738 = vstv %s737
        %v739 = vmul.f32 %v738, %v560
        %v740 = vmul.f32 %v738, %v561
        %v743 = vrot.slane %v739, 1
        %v744 = vrot.slane %v740, 1
        %v745 = vsel %vm692, %v743, %v744
        %v748 = vadd.f32 %v735, %v745
        %v749 = vadd.f32 %v736, %v744
        %s750 = sld [smem:[#allocation7 + $0x7]]
        %v751 = vstv %s750
        %v752 = vmul.f32 %v751, %v560
        %v753 = vmul.f32 %v751, %v561
        %v756 = vrot.slane %v752, 1
        %v757 = vrot.slane %v753, 1
        %v758 = vsel %vm692, %v756, %v757
        %759 = vrot.lane.b32.xlu0 %v758, 127
        %v760 = vpop.permute.xlu0 %759
        %761 = vrot.lane.b32.xlu0 %v757, 127
        %v762 = vpop.permute.xlu0 %761
        %v765 = vadd.f32 %v748, %v760
        %v766 = vadd.f32 %v749, %v762
        %s767 = sld [smem:[#allocation7 + $0x8]]
        %v768 = vstv %s767
        %v769 = vmul.f32 %v768, %v666
        %v770 = vmul.f32 %v768, %v667
        %v771 = vadd.f32 %v765, %v769
        %v772 = vadd.f32 %v766, %v770
        %s773 = sld [smem:[#allocation7 + $0x9]]
        %v774 = vstv %s773
        %v775 = vmul.f32 %v774, %v666
        %v776 = vmul.f32 %v774, %v667
        %779 = vrot.lane.b32.xlu0 %v775, 127
        %v780 = vpop.permute.xlu0 %779
        %781 = vrot.lane.b32.xlu0 %v776, 127
        %v782 = vpop.permute.xlu0 %781
        %v785 = vadd.f32 %v771, %v780
        %v786 = vadd.f32 %v772, %v782
        %s787 = sld [smem:[#allocation7 + $0xa]]
        %v788 = vstv %s787
        %v789 = vmul.f32 %v788, %v666
        %v790 = vmul.f32 %v788, %v667
        %v793 = vrot.slane %v789, 1
        %v794 = vrot.slane %v790, 1
        %v795 = vsel %vm692, %v793, %v794
        %v798 = vadd.f32 %v785, %v795
        %v799 = vadd.f32 %v786, %v794
        %s800 = sld [smem:[#allocation7 + $0xb]]
        %v801 = vstv %s800
        %v802 = vmul.f32 %v801, %v666
        %v803 = vmul.f32 %v801, %v667
        %v806 = vrot.slane %v802, 1
        %v807 = vrot.slane %v803, 1
        %v808 = vsel %vm692, %v806, %v807
        %809 = vrot.lane.b32.xlu0 %v808, 127
        %v810 = vpop.permute.xlu0 %809
        %811 = vrot.lane.b32.xlu0 %v807, 127
        %v812 = vpop.permute.xlu0 %811
        %v815 = vadd.f32 %v798, %v810
        %v816 = vadd.f32 %v799, %v812
        %s817 = sld [smem:[#allocation8]]
        %v818 = vstv %s817
        %v819 = vadd.f32 %v815, %v818
        %v820 = vadd.f32 %v816, %v818
        %v821 = vmax.f32 %v819, 0.0
        %v822 = vmax.f32 %v820, 0.0
        %s823 = sld [smem:[#allocation7 + $0xc]]
        %v824 = vstv %s823
        %v825 = vmul.f32 %v824, %v454
        %v826 = vmul.f32 %v824, %v455
        %s827 = sld [smem:[#allocation7 + $0xd]]
        %v828 = vstv %s827
        %v829 = vmul.f32 %v828, %v454
        %v830 = vmul.f32 %v828, %v455
        %833 = vrot.lane.b32.xlu0 %v829, 127
        %v834 = vpop.permute.xlu0 %833
        %835 = vrot.lane.b32.xlu0 %v830, 127
        %v836 = vpop.permute.xlu0 %835
        %v839 = vadd.f32 %v825, %v834
        %v840 = vadd.f32 %v826, %v836
        %s841 = sld [smem:[#allocation7 + $0xe]]
        %v842 = vstv %s841
        %v843 = vmul.f32 %v842, %v454
        %v844 = vmul.f32 %v842, %v455
        %v847 = vrot.slane %v843, 1
        %v848 = vrot.slane %v844, 1
        %v849 = vsel %vm692, %v847, %v848
        %v852 = vadd.f32 %v839, %v849
        %v853 = vadd.f32 %v840, %v848
        %s854 = sld [smem:[#allocation7 + $0xf]]
        %v855 = vstv %s854
        %v856 = vmul.f32 %v855, %v454
        %v857 = vmul.f32 %v855, %v455
        %v860 = vrot.slane %v856, 1
        %v861 = vrot.slane %v857, 1
        %v862 = vsel %vm692, %v860, %v861
        %863 = vrot.lane.b32.xlu0 %v862, 127
        %v864 = vpop.permute.xlu0 %863
        %865 = vrot.lane.b32.xlu0 %v861, 127
        %v866 = vpop.permute.xlu0 %865
        %v869 = vadd.f32 %v852, %v864
        %v870 = vadd.f32 %v853, %v866
        %s871 = sld [smem:[#allocation7 + $0x10]]
        %v872 = vstv %s871
        %v873 = vmul.f32 %v872, %v560
        %v874 = vmul.f32 %v872, %v561
        %v875 = vadd.f32 %v869, %v873
        %v876 = vadd.f32 %v870, %v874
        %s877 = sld [smem:[#allocation7 + $0x11]]
        %v878 = vstv %s877
        %v879 = vmul.f32 %v878, %v560
        %v880 = vmul.f32 %v878, %v561
        %883 = vrot.lane.b32.xlu0 %v879, 127
        %v884 = vpop.permute.xlu0 %883
        %885 = vrot.lane.b32.xlu0 %v880, 127
        %v886 = vpop.permute.xlu0 %885
        %v889 = vadd.f32 %v875, %v884
        %v890 = vadd.f32 %v876, %v886
        %s891 = sld [smem:[#allocation7 + $0x12]]
        %v892 = vstv %s891
        %v893 = vmul.f32 %v892, %v560
        %v894 = vmul.f32 %v892, %v561
        %v897 = vrot.slane %v893, 1
        %v898 = vrot.slane %v894, 1
        %v899 = vsel %vm692, %v897, %v898
        %v902 = vadd.f32 %v889, %v899
        %v903 = vadd.f32 %v890, %v898
        %s904 = sld [smem:[#allocation7 + $0x13]]
        %v905 = vstv %s904
        %v906 = vmul.f32 %v905, %v560
        %v907 = vmul.f32 %v905, %v561
        %v910 = vrot.slane %v906, 1
        %v911 = vrot.slane %v907, 1
        %v912 = vsel %vm692, %v910, %v911
        %913 = vrot.lane.b32.xlu0 %v912, 127
        %v914 = vpop.permute.xlu0 %913
        %915 = vrot.lane.b32.xlu0 %v911, 127
        %v916 = vpop.permute.xlu0 %915
        %v919 = vadd.f32 %v902, %v914
        %v920 = vadd.f32 %v903, %v916
        %s921 = sld [smem:[#allocation7 + $0x14]]
        %v922 = vstv %s921
        %v923 = vmul.f32 %v922, %v666
        %v924 = vmul.f32 %v922, %v667
        %v925 = vadd.f32 %v919, %v923
        %v926 = vadd.f32 %v920, %v924
        %s927 = sld [smem:[#allocation7 + $0x15]]
        %v928 = vstv %s927
        %v929 = vmul.f32 %v928, %v666
        %v930 = vmul.f32 %v928, %v667
        %933 = vrot.lane.b32.xlu0 %v929, 127
        %v934 = vpop.permute.xlu0 %933
        %935 = vrot.lane.b32.xlu0 %v930, 127
        %v936 = vpop.permute.xlu0 %935
        %v939 = vadd.f32 %v925, %v934
        %v940 = vadd.f32 %v926, %v936
        %s941 = sld [smem:[#allocation7 + $0x16]]
        %v942 = vstv %s941
        %v943 = vmul.f32 %v942, %v666
        %v944 = vmul.f32 %v942, %v667
        %v947 = vrot.slane %v943, 1
        %v948 = vrot.slane %v944, 1
        %v949 = vsel %vm692, %v947, %v948
        %v952 = vadd.f32 %v939, %v949
        %v953 = vadd.f32 %v940, %v948
        %s954 = sld [smem:[#allocation7 + $0x17]]
        %v955 = vstv %s954
        %v956 = vmul.f32 %v955, %v666
        %v957 = vmul.f32 %v955, %v667
        %v960 = vrot.slane %v956, 1
        %v961 = vrot.slane %v957, 1
        %v962 = vsel %vm692, %v960, %v961
        %963 = vrot.lane.b32.xlu0 %v962, 127
        %v964 = vpop.permute.xlu0 %963
        %965 = vrot.lane.b32.xlu0 %v961, 127
        %v966 = vpop.permute.xlu0 %965
        %v969 = vadd.f32 %v952, %v964
        %v970 = vadd.f32 %v953, %v966
        %s971 = sld [smem:[#allocation8 + $0x1]]
        %v972 = vstv %s971
        %v973 = vadd.f32 %v969, %v972
        %v974 = vadd.f32 %v970, %v972
        %v975 = vmax.f32 %v973, 0.0
        %v976 = vmax.f32 %v974, 0.0
        %s977 = sld [smem:[#allocation7 + $0x18]]
        %v978 = vstv %s977
        %v979 = vmul.f32 %v978, %v454
        %v980 = vmul.f32 %v978, %v455
        %s981 = sld [smem:[#allocation7 + $0x19]]
        %v982 = vstv %s981
        %v983 = vmul.f32 %v982, %v454
        %v984 = vmul.f32 %v982, %v455
        %987 = vrot.lane.b32.xlu0 %v983, 127
        %v988 = vpop.permute.xlu0 %987
        %989 = vrot.lane.b32.xlu0 %v984, 127
        %v990 = vpop.permute.xlu0 %989
        %v993 = vadd.f32 %v979, %v988
        %v994 = vadd.f32 %v980, %v990
        %s995 = sld [smem:[#allocation7 + $0x1a]]
        %v996 = vstv %s995
        %v997 = vmul.f32 %v996, %v454
        %v998 = vmul.f32 %v996, %v455
        %v1001 = vrot.slane %v997, 1
        %v1002 = vrot.slane %v998, 1
        %v1003 = vsel %vm692, %v1001, %v1002
        %v1006 = vadd.f32 %v993, %v1003
        %v1007 = vadd.f32 %v994, %v1002
        %s1008 = sld [smem:[#allocation7 + $0x1b]]
        %v1009 = vstv %s1008
        %v1010 = vmul.f32 %v1009, %v454
        %v1011 = vmul.f32 %v1009, %v455
        %v1014 = vrot.slane %v1010, 1
        %v1015 = vrot.slane %v1011, 1
        %v1016 = vsel %vm692, %v1014, %v1015
        %1017 = vrot.lane.b32.xlu0 %v1016, 127
        %v1018 = vpop.permute.xlu0 %1017
        %1019 = vrot.lane.b32.xlu0 %v1015, 127
        %v1020 = vpop.permute.xlu0 %1019
        %v1023 = vadd.f32 %v1006, %v1018
        %v1024 = vadd.f32 %v1007, %v1020
        %s1025 = sld [smem:[#allocation7 + $0x1c]]
        %v1026 = vstv %s1025
        %v1027 = vmul.f32 %v1026, %v560
        %v1028 = vmul.f32 %v1026, %v561
        %v1029 = vadd.f32 %v1023, %v1027
        %v1030 = vadd.f32 %v1024, %v1028
        %s1031 = sld [smem:[#allocation7 + $0x1d]]
        %v1032 = vstv %s1031
        %v1033 = vmul.f32 %v1032, %v560
        %v1034 = vmul.f32 %v1032, %v561
        %1037 = vrot.lane.b32.xlu0 %v1033, 127
        %v1038 = vpop.permute.xlu0 %1037
        %1039 = vrot.lane.b32.xlu0 %v1034, 127
        %v1040 = vpop.permute.xlu0 %1039
        %v1043 = vadd.f32 %v1029, %v1038
        %v1044 = vadd.f32 %v1030, %v1040
        %s1045 = sld [smem:[#allocation7 + $0x1e]]
        %v1046 = vstv %s1045
        %v1047 = vmul.f32 %v1046, %v560
        %v1048 = vmul.f32 %v1046, %v561
        %v1051 = vrot.slane %v1047, 1
        %v1052 = vrot.slane %v1048, 1
        %v1053 = vsel %vm692, %v1051, %v1052
        %v1056 = vadd.f32 %v1043, %v1053
        %v1057 = vadd.f32 %v1044, %v1052
        %s1058 = sld [smem:[#allocation7 + $0x1f]]
        %v1059 = vstv %s1058
        %v1060 = vmul.f32 %v1059, %v560
        %v1061 = vmul.f32 %v1059, %v561
        %v1064 = vrot.slane %v1060, 1
        %v1065 = vrot.slane %v1061, 1
        %v1066 = vsel %vm692, %v1064, %v1065
        %1067 = vrot.lane.b32.xlu0 %v1066, 127
        %v1068 = vpop.permute.xlu0 %1067
        %1069 = vrot.lane.b32.xlu0 %v1065, 127
        %v1070 = vpop.permute.xlu0 %1069
        %v1073 = vadd.f32 %v1056, %v1068
        %v1074 = vadd.f32 %v1057, %v1070
        %s1075 = sld [smem:[#allocation7 + $0x20]]
        %v1076 = vstv %s1075
        %v1077 = vmul.f32 %v1076, %v666
        %v1078 = vmul.f32 %v1076, %v667
        %v1079 = vadd.f32 %v1073, %v1077
        %v1080 = vadd.f32 %v1074, %v1078
        %s1081 = sld [smem:[#allocation7 + $0x21]]
        %v1082 = vstv %s1081
        %v1083 = vmul.f32 %v1082, %v666
        %v1084 = vmul.f32 %v1082, %v667
        %1087 = vrot.lane.b32.xlu0 %v1083, 127
        %v1088 = vpop.permute.xlu0 %1087
        %1089 = vrot.lane.b32.xlu0 %v1084, 127
        %v1090 = vpop.permute.xlu0 %1089
        %v1093 = vadd.f32 %v1079, %v1088
        %v1094 = vadd.f32 %v1080, %v1090
        %s1095 = sld [smem:[#allocation7 + $0x22]]
        %v1096 = vstv %s1095
        %v1097 = vmul.f32 %v1096, %v666
        %v1098 = vmul.f32 %v1096, %v667
        %v1101 = vrot.slane %v1097, 1
        %v1102 = vrot.slane %v1098, 1
        %v1103 = vsel %vm692, %v1101, %v1102
        %v1106 = vadd.f32 %v1093, %v1103
        %v1107 = vadd.f32 %v1094, %v1102
        %s1108 = sld [smem:[#allocation7 + $0x23]]
        %v1109 = vstv %s1108
        %v1110 = vmul.f32 %v1109, %v666
        %v1111 = vmul.f32 %v1109, %v667
        %v1114 = vrot.slane %v1110, 1
        %v1115 = vrot.slane %v1111, 1
        %v1116 = vsel %vm692, %v1114, %v1115
        %1117 = vrot.lane.b32.xlu0 %v1116, 127
        %v1118 = vpop.permute.xlu0 %1117
        %1119 = vrot.lane.b32.xlu0 %v1115, 127
        %v1120 = vpop.permute.xlu0 %1119
        %v1123 = vadd.f32 %v1106, %v1118
        %v1124 = vadd.f32 %v1107, %v1120
        %s1125 = sld [smem:[#allocation8 + $0x2]]
        %v1126 = vstv %s1125
        %v1127 = vadd.f32 %v1123, %v1126
        %v1128 = vadd.f32 %v1124, %v1126
        %v1129 = vmax.f32 %v1127, 0.0
        %v1130 = vmax.f32 %v1128, 0.0
        %s1131 = sld [smem:[#allocation10]]
        %v1132 = vstv %s1131
        %v1133 = vmul.f32 %v1132, %v821
        %v1134 = vmul.f32 %v1132, %v822
        %s1135 = sld [smem:[#allocation10 + $0x1]]
        %v1136 = vstv %s1135
        %v1137 = vmul.f32 %v1136, %v821
        %v1138 = vmul.f32 %v1136, %v822
        %1141 = vrot.lane.b32.xlu0 %v1137, 126
        %v1142 = vpop.permute.xlu0 %1141
        %1143 = vrot.lane.b32.xlu0 %v1138, 126
        %v1144 = vpop.permute.xlu0 %1143
        %v1147 = vadd.f32 %v1133, %v1142
        %v1148 = vadd.f32 %v1134, %v1144
        %s1149 = sld [smem:[#allocation10 + $0x2]]
        %v1150 = vstv %s1149
        %v1151 = vmul.f32 %v1150, %v821
        %v1152 = vmul.f32 %v1150, %v822
        %vm1155 = vcmask 1045504
        %v1156 = vrot.slane %v1151, 2
        %v1157 = vrot.slane %v1152, 2
        %v1158 = vsel %vm1155, %v1156, %v1157
        %v1161 = vadd.f32 %v1147, %v1158
        %v1162 = vadd.f32 %v1148, %v1157
        %s1163 = sld [smem:[#allocation10 + $0x3]]
        %v1164 = vstv %s1163
        %v1165 = vmul.f32 %v1164, %v821
        %v1166 = vmul.f32 %v1164, %v822
        %v1169 = vrot.slane %v1165, 2
        %v1170 = vrot.slane %v1166, 2
        %v1171 = vsel %vm1155, %v1169, %v1170
        %1172 = vrot.lane.b32.xlu0 %v1171, 126
        %v1173 = vpop.permute.xlu0 %1172
        %1174 = vrot.lane.b32.xlu0 %v1170, 126
        %v1175 = vpop.permute.xlu0 %1174
        %v1178 = vadd.f32 %v1161, %v1173
        %v1179 = vadd.f32 %v1162, %v1175
        %s1180 = sld [smem:[#allocation10 + $0x4]]
        %v1181 = vstv %s1180
        %v1182 = vmul.f32 %v1181, %v975
        %v1183 = vmul.f32 %v1181, %v976
        %v1184 = vadd.f32 %v1178, %v1182
        %v1185 = vadd.f32 %v1179, %v1183
        %s1186 = sld [smem:[#allocation10 + $0x5]]
        %v1187 = vstv %s1186
        %v1188 = vmul.f32 %v1187, %v975
        %v1189 = vmul.f32 %v1187, %v976
        %1192 = vrot.lane.b32.xlu0 %v1188, 126
        %v1193 = vpop.permute.xlu0 %1192
        %1194 = vrot.lane.b32.xlu0 %v1189, 126
        %v1195 = vpop.permute.xlu0 %1194
        %v1198 = vadd.f32 %v1184, %v1193
        %v1199 = vadd.f32 %v1185, %v1195
        %s1200 = sld [smem:[#allocation10 + $0x6]]
        %v1201 = vstv %s1200
        %v1202 = vmul.f32 %v1201, %v975
        %v1203 = vmul.f32 %v1201, %v976
        %v1206 = vrot.slane %v1202, 2
        %v1207 = vrot.slane %v1203, 2
        %v1208 = vsel %vm1155, %v1206, %v1207
        %v1211 = vadd.f32 %v1198, %v1208
        %v1212 = vadd.f32 %v1199, %v1207
        %s1213 = sld [smem:[#allocation10 + $0x7]]
        %v1214 = vstv %s1213
        %v1215 = vmul.f32 %v1214, %v975
        %v1216 = vmul.f32 %v1214, %v976
        %v1219 = vrot.slane %v1215, 2
        %v1220 = vrot.slane %v1216, 2
        %v1221 = vsel %vm1155, %v1219, %v1220
        %1222 = vrot.lane.b32.xlu0 %v1221, 126
        %v1223 = vpop.permute.xlu0 %1222
        %1224 = vrot.lane.b32.xlu0 %v1220, 126
        %v1225 = vpop.permute.xlu0 %1224
        %v1228 = vadd.f32 %v1211, %v1223
        %v1229 = vadd.f32 %v1212, %v1225
        %s1230 = sld [smem:[#allocation10 + $0x8]]
        %v1231 = vstv %s1230
        %v1232 = vmul.f32 %v1231, %v1129
        %v1233 = vmul.f32 %v1231, %v1130
        %v1234 = vadd.f32 %v1228, %v1232
        %v1235 = vadd.f32 %v1229, %v1233
        %s1236 = sld [smem:[#allocation10 + $0x9]]
        %v1237 = vstv %s1236
        %v1238 = vmul.f32 %v1237, %v1129
        %v1239 = vmul.f32 %v1237, %v1130
        %1242 = vrot.lane.b32.xlu0 %v1238, 126
        %v1243 = vpop.permute.xlu0 %1242
        %1244 = vrot.lane.b32.xlu0 %v1239, 126
        %v1245 = vpop.permute.xlu0 %1244
        %v1248 = vadd.f32 %v1234, %v1243
        %v1249 = vadd.f32 %v1235, %v1245
        %s1250 = sld [smem:[#allocation10 + $0xa]]
        %v1251 = vstv %s1250
        %v1252 = vmul.f32 %v1251, %v1129
        %v1253 = vmul.f32 %v1251, %v1130
        %v1256 = vrot.slane %v1252, 2
        %v1257 = vrot.slane %v1253, 2
        %v1258 = vsel %vm1155, %v1256, %v1257
        %v1261 = vadd.f32 %v1248, %v1258
        %v1262 = vadd.f32 %v1249, %v1257
        %s1263 = sld [smem:[#allocation10 + $0xb]]
        %v1264 = vstv %s1263
        %v1265 = vmul.f32 %v1264, %v1129
        %v1266 = vmul.f32 %v1264, %v1130
        %v1269 = vrot.slane %v1265, 2
        %v1270 = vrot.slane %v1266, 2
        %v1271 = vsel %vm1155, %v1269, %v1270
        %1272 = vrot.lane.b32.xlu0 %v1271, 126
        %v1273 = vpop.permute.xlu0 %1272
        %1274 = vrot.lane.b32.xlu0 %v1270, 126
        %v1275 = vpop.permute.xlu0 %1274
        %v1278 = vadd.f32 %v1261, %v1273
        %v1279 = vadd.f32 %v1262, %v1275
        %s1280 = sld [smem:[#allocation2]]
        %v1281 = vstv %s1280
        %v1282 = vadd.f32 %v1278, %v1281
        %v1283 = vadd.f32 %v1279, %v1281
        %v1284 = vand.u32 2147483647, %v1282
        %v1285 = vand.u32 2147483647, %v1283
        %v1286 = vsub.f32 0.0, %v1284
        %v1287 = vsub.f32 0.0, %v1285
        %v1288 = vmul.f32 %v1286, 1.442695
        %v1289 = vpow.pop %v1288
        %v1290 = vmul.f32 %v1287, 1.442695
        %v1291 = vpow.pop %v1290
        %vm1292 = vcmp.ge.f32.partialorder %v1282, 0.0
        %vm1293 = vcmp.ge.f32.partialorder %v1283, 0.0
        %v1294 = vsel %vm1292, 1.0, %v1289
        %v1295 = vsel %vm1293, 1.0, %v1291
        %v1296 = vadd.f32 %v1289, 1.0
        %v1297 = vadd.f32 %v1291, 1.0
        %v1298 = vrcp.pop %v1296
        %v1299 = vmul.f32 %v1294, %v1298
        %v1300 = vrcp.pop %v1297
        %v1301 = vmul.f32 %v1295, %v1300
        %vm1302 = vcmask 105472
        %1303 = vst.msk [vmem:[%s343] sm:$0xff] %vm1302, %v1299
        %vm1304 = vcmask 102400
        %1305 = vst.msk [vmem:[%s343 + $0x8] sm:$0x1f] %vm1304, %v1301
        %p1306 = scmp.lt.s32.totalorder %s22, 1
        %s1307 = scalar_select %p1306, %s22, 1
        %s1308 = smul.addr %s1307, 2
        %s1309 = smul.addr %s1308, 8
        %s1310 = scalar_lea.vmem %s7, %s1309
        // Predicated region
        $region69: #{trained_cnn_forward.1} parent=47 // pred_check
          %p1311 = pneg %p192
        $region70: #{trained_cnn_forward.1} parent=47 // pred_check_branch
          %1313 = sbr.rel (%p1311) target = $region72
        $region71: #{trained_cnn_forward.1} parent=47 // pred_region
          _
        $region72: #{trained_cnn_forward.1} parent=47 // pred_fallthru
          _
      $region48: #{trained_cnn_forward.1} parent=5 // pred_fallthru
        _
      %p1314 = scmp.le.s32.totalorder 2, %s17
      // Predicated region
      $region73: #{trained_cnn_forward.1} parent=5 // pred_check
        %p1315 = pneg %p1314
      $region74: #{trained_cnn_forward.1} parent=5 // pred_check_branch
        %1317 = sbr.rel (%p1315) target = $region76
      $region75: #{trained_cnn_forward.1} parent=5 // pred_region
        %s1318 = ssub.s32 %s17, 2
        // Predicated region
        $region77: #{trained_cnn_forward.1} parent=75 // pred_check
          %p1319 = pneg %p198
        $region78: #{trained_cnn_forward.1} parent=75 // pred_check_branch
          %1321 = sbr.rel (%p1319) target = $region80
        $region79: #{trained_cnn_forward.1} parent=75 // pred_region
          %p1322 = scmp.lt.s32.totalorder %s23, 1
          %s1323 = scalar_select %p1322, %s23, 1
          %s1324 = smul.addr %s1323, 2
          %s1325 = smul.addr %s1324, 8
          %s1326 = scalar_lea.vmem %s7, %s1325
        $region80: #{trained_cnn_forward.1} parent=75 // pred_fallthru
          _
      $region76: #{trained_cnn_forward.1} parent=5 // pred_fallthru
        _
    $region6: #{trained_cnn_forward.1} parent=1 // loop_footer
      %s21 = sadd.s32 1, %s17
    $region7: #{trained_cnn_forward.1} parent=1 // loop_footer_branch
      %16 = sbr.rel target = $region3
    $region8: #{trained_cnn_forward.1} parent=1 // loop_exit
      _
    %1327 = vsyncpa [#allocation4], 1
    %s1328 = scalar_lea.sflag [#allocation4], 1
    %1329 = vsyncpa %s1328, 1
    %1330 = vsyncpa [#allocation6], 1
    %1331 = vsyncpa [#allocation9], 1

</llo_original>
